<compile_context>
chip_gen: v7x
topology: tpu7x:2x2x1
jax: 0.10.0
libtpu: 0.0.40
codegen_flags: <defaults>
</compile_context>

<pallas_src>
import functools
import math

import jax
import jax.numpy as jnp
from jax import lax
from jax.experimental import pallas as pl
from jax.experimental.pallas import tpu as pltpu


def _mha_kernel(vl_ref,                          # (Bt, 1) int32
                q_ref, k_ref, v_ref,             # (Bt, Lq, Dq)/(Bt, Lk, Dk)/(Bt, Lk, Dv)
                wq_ref, wk_ref, wv_ref, wo_ref,  # (Din, H) each, pre-transposed
                o_ref,                           # (Bt, Lq, H)
                *, num_heads):
    Bt, Lq, Dq = q_ref.shape
    _, Lk, Dk = k_ref.shape
    Dv = v_ref.shape[2]
    H = wq_ref.shape[1]
    d = H // num_heads
    scale = 1.0 / math.sqrt(d)
    cdt = q_ref.dtype          # compute dtype fed to the MXU (bf16 stays bf16)

    # Flatten (Bt, L, D) -> (Bt*L, D): sublane-dense projection matmuls.
    q2 = q_ref[...].reshape(Bt * Lq, Dq)
    k2 = k_ref[...].reshape(Bt * Lk, Dk)
    v2 = v_ref[...].reshape(Bt * Lk, Dv)

    # Projections in the storage dtype, f32 accumulation. Fold 1/sqrt(d) into Q.
    Q = (jnp.dot(q2, wq_ref[...], preferred_element_type=jnp.float32) * scale).astype(cdt)
    K = jnp.dot(k2, wk_ref[...], preferred_element_type=jnp.float32).astype(cdt)
    V = jnp.dot(v2, wv_ref[...], preferred_element_type=jnp.float32).astype(cdt)

    # Masked-softmax mask (shared across heads): key position >= valid_len.
    col = lax.broadcasted_iota(jnp.int32, (Bt, Lq, Lk), 2)
    vlen = vl_ref[...].reshape(Bt, 1, 1)
    valid = col < vlen                                             # (Bt, Lq, Lk)

    wo = wo_ref[...]
    out_acc = jnp.zeros((Bt * Lq, H), jnp.float32)
    for h in range(num_heads):                 # static & small -> unrolled
        sl = slice(h * d, (h + 1) * d)
        Qh = Q[:, sl].reshape(Bt, Lq, d)
        Kh = K[:, sl].reshape(Bt, Lk, d)
        Vh = V[:, sl].reshape(Bt, Lk, d)

        # scores = Qh @ Kh^T (batched over Bt, contract head dim)
        s = jnp.einsum('bqd,bkd->bqk', Qh, Kh,
                       preferred_element_type=jnp.float32)         # (Bt, Lq, Lk)
        s = jnp.where(valid, s, -1e6)

        # Softmax along keys, f32 math, EUP approx reciprocal.
        m = jnp.max(s, axis=-1, keepdims=True)
        p = jnp.exp(s - m)
        attn = p * pl.reciprocal(jnp.sum(p, axis=-1, keepdims=True), approx=True)

        oh = jnp.einsum('bqk,bkd->bqd', attn.astype(cdt), Vh,
                        preferred_element_type=jnp.float32)        # (Bt, Lq, d)

        # concat(heads) @ Wo == sum_h  head_h @ Wo[h*d:(h+1)*d, :]
        out_acc = out_acc + jnp.dot(oh.reshape(Bt * Lq, d).astype(cdt),
                                    wo[sl, :],
                                    preferred_element_type=jnp.float32)

    o_ref[...] = out_acc.reshape(Bt, Lq, H).astype(o_ref.dtype)


def multi_head_attention(query, key, value, valid_lens,
                         wq, wk, wv, wo, *, num_heads):
    """query: (B, Lq, Dq), key: (B, Lk, Dk), value: (B, Lk, Dv),
    valid_lens: (B,) int32. wq/wk/wv/wo: nn.Linear weights of shape (out, in)."""
    B, Lq, Dq = query.shape
    _, Lk, Dk = key.shape
    Dv = value.shape[2]
    H = wq.shape[0]
    assert H % num_heads == 0

    # Glue: pre-transpose weights to (in, out) so the kernel does x @ W directly.
    wq_t, wk_t, wv_t, wo_t = wq.T, wk.T, wv.T, wo.T

    # Batch tile: whole batch for small B (one dense grid step); for larger B
    # use 8-batch tiles so the valid-lens block stays (8,128)-legal.
    Bt = B if (B <= 8 or B % 8 != 0) else 8
    grid = (B // Bt,)

    vl2 = valid_lens.astype(jnp.int32).reshape(B, 1)

    kernel = functools.partial(_mha_kernel, num_heads=num_heads)

    return pl.pallas_call(
        kernel,
        out_shape=jax.ShapeDtypeStruct((B, Lq, H), query.dtype),
        grid=grid,
        in_specs=[
            pl.BlockSpec((Bt, 1), lambda i: (i, 0)),
            pl.BlockSpec((Bt, Lq, Dq), lambda i: (i, 0, 0)),
            pl.BlockSpec((Bt, Lk, Dk), lambda i: (i, 0, 0)),
            pl.BlockSpec((Bt, Lk, Dv), lambda i: (i, 0, 0)),
            pl.BlockSpec((Dq, H), lambda i: (0, 0)),
            pl.BlockSpec((Dk, H), lambda i: (0, 0)),
            pl.BlockSpec((Dv, H), lambda i: (0, 0)),
            pl.BlockSpec((H, H), lambda i: (0, 0)),
        ],
        out_specs=pl.BlockSpec((Bt, Lq, H), lambda i: (i, 0, 0)),
        compiler_params=pltpu.CompilerParams(
            dimension_semantics=("parallel",)),
    )(vl2, query, key, value, wq_t, wk_t, wv_t, wo_t)


def _reference(query, key, value, valid_lens, wq, wk, wv, wo, num_heads):
    """Pure-JAX reference mirroring the PyTorch module (eval mode)."""
    def proj(x, w):
        return jnp.einsum('bld,hd->blh', x, w)

    def split_heads(x):  # transpose_qkv
        B, L, H = x.shape
        x = x.reshape(B, L, num_heads, H // num_heads)
        x = jnp.transpose(x, (0, 2, 1, 3))
        return x.reshape(B * num_heads, L, H // num_heads)

    Q = split_heads(proj(query, wq))
    K = split_heads(proj(key, wk))
    V = split_heads(proj(value, wv))
    d = Q.shape[-1]
    scores = jnp.einsum('bqd,bkd->bqk', Q, K) / math.sqrt(d)
    vl = jnp.repeat(valid_lens, num_heads, axis=0)
    mask = jnp.arange(K.shape[1])[None, None, :] < vl[:, None, None]
    scores = jnp.where(mask, scores, -1e6)
    attn = jax.nn.softmax(scores, axis=-1)
    out = jnp.einsum('bqk,bkd->bqd', attn, V)
    # transpose_output
    BH, Lq, dh = out.shape
    B = BH // num_heads
    out = out.reshape(B, num_heads, Lq, dh).transpose(0, 2, 1, 3).reshape(B, Lq, -1)
    return jnp.einsum('blh,oh->blo', out, wo)


if __name__ == "__main__":
    # Small shapes consistent with the module.
    batch = 2
    num_queries = 8
    num_kvpairs = 8
    num_hiddens = 32
    num_heads = 4
    key_size = query_size = value_size = num_hiddens

    root = jax.random.PRNGKey(0)
    kq, kk, kv, ko, kx1, kx2, kx3 = jax.random.split(root, 7)

    def init_linear(k, out_f, in_f):
        bound = 1.0 / math.sqrt(in_f)
        return jax.random.uniform(k, (out_f, in_f), jnp.float32, -bound, bound)

    W_q = init_linear(kq, num_hiddens, query_size)
    W_k = init_linear(kk, num_hiddens, key_size)
    W_v = init_linear(kv, num_hiddens, value_size)
    W_o = init_linear(ko, num_hiddens, num_hiddens)

    query = jax.random.normal(kx1, (batch, num_queries, query_size), jnp.float32)
    key = jax.random.normal(kx2, (batch, num_kvpairs, key_size), jnp.float32)
    value = jax.random.normal(kx3, (batch, num_kvpairs, value_size), jnp.float32)
    valid_lens = jnp.array([3, 6], dtype=jnp.int32)

    out = multi_head_attention(query, key, value, valid_lens,
                               W_q, W_k, W_v, W_o, num_heads=num_heads)
    out = jax.block_until_ready(out)

    ref = _reference(query, key, value, valid_lens, W_q, W_k, W_v, W_o, num_heads)
    assert out.shape == (batch, num_queries, num_hiddens)
    err = float(jnp.max(jnp.abs(out - ref)))
    # Slightly looser tolerance because the softmax denominator uses the EUP
    # approximate reciprocal (per perf review); still far tighter than any
    # structural error would allow.
    assert jnp.allclose(out, ref, atol=2e-3, rtol=2e-3), err

    print("KERNEL_OK")
</pallas_src>

<mosaic_0001>
module attributes {stable_mosaic.version = 11 : i64} {
  func.func @_mha_kernel(%arg0: i32, %arg1: memref<2x1xi32, #tpu.memory_space<vmem>>, %arg2: memref<2x8x32xf32, #tpu.memory_space<vmem>>, %arg3: memref<2x8x32xf32, #tpu.memory_space<vmem>>, %arg4: memref<2x8x32xf32, #tpu.memory_space<vmem>>, %arg5: memref<32x32xf32, #tpu.memory_space<vmem>>, %arg6: memref<32x32xf32, #tpu.memory_space<vmem>>, %arg7: memref<32x32xf32, #tpu.memory_space<vmem>>, %arg8: memref<32x32xf32, #tpu.memory_space<vmem>>, %arg9: memref<2x8x32xf32, #tpu.memory_space<vmem>>) attributes {dimension_semantics = [#tpu.dimension_semantics<parallel>], iteration_bounds = array<i64: 1>, scalar_prefetch = 0 : i64, scratch_operands = 0 : i64, tpu.core_type = #tpu.core_type<tc>, window_params = [{transform_indices = @transform_0, window_bounds = array<i64: 2, 1>}, {transform_indices = @transform_1, window_bounds = array<i64: 2, 8, 32>}, {transform_indices = @transform_2, window_bounds = array<i64: 2, 8, 32>}, {transform_indices = @transform_3, window_bounds = array<i64: 2, 8, 32>}, {pipeline_mode = #tpu.pipeline_mode<synchronous>, transform_indices = @transform_4, window_bounds = array<i64: 32, 32>}, {pipeline_mode = #tpu.pipeline_mode<synchronous>, transform_indices = @transform_5, window_bounds = array<i64: 32, 32>}, {pipeline_mode = #tpu.pipeline_mode<synchronous>, transform_indices = @transform_6, window_bounds = array<i64: 32, 32>}, {pipeline_mode = #tpu.pipeline_mode<synchronous>, transform_indices = @transform_7, window_bounds = array<i64: 32, 32>}, {transform_indices = @transform_8, window_bounds = array<i64: 2, 8, 32>}]} {
    %c0 = arith.constant 0 : index
    %c0_0 = arith.constant 0 : index
    %c0_1 = arith.constant 0 : index
    %0 = vector.load %arg2[%c0, %c0_0, %c0_1] : memref<2x8x32xf32, #tpu.memory_space<vmem>>, vector<2x8x32xf32>
    %1 = vector.shape_cast %0 : vector<2x8x32xf32> to vector<16x32xf32>
    %c0_2 = arith.constant 0 : index
    %c0_3 = arith.constant 0 : index
    %c0_4 = arith.constant 0 : index
    %2 = vector.load %arg3[%c0_2, %c0_3, %c0_4] : memref<2x8x32xf32, #tpu.memory_space<vmem>>, vector<2x8x32xf32>
    %3 = vector.shape_cast %2 : vector<2x8x32xf32> to vector<16x32xf32>
    %c0_5 = arith.constant 0 : index
    %c0_6 = arith.constant 0 : index
    %c0_7 = arith.constant 0 : index
    %4 = vector.load %arg4[%c0_5, %c0_6, %c0_7] : memref<2x8x32xf32, #tpu.memory_space<vmem>>, vector<2x8x32xf32>
    %5 = vector.shape_cast %4 : vector<2x8x32xf32> to vector<16x32xf32>
    %c0_8 = arith.constant 0 : index
    %c0_9 = arith.constant 0 : index
    %6 = vector.load %arg5[%c0_8, %c0_9] : memref<32x32xf32, #tpu.memory_space<vmem>>, vector<32x32xf32>
    %cst = arith.constant dense<0.000000e+00> : vector<16x32xf32>
    %7 = tpu.matmul %1, %6, %cst {dimension_numbers = #tpu.dot_dimension_numbers<[1], [0], [0], [1], [0, 0, 1, 1], [], []>} : vector<16x32xf32>, vector<32x32xf32>, vector<16x32xf32> -> vector<16x32xf32>
    %cst_10 = arith.constant 0.353553385 : f32
    %8 = vector.broadcast %cst_10 : f32 to vector<16x32xf32>
    %9 = arith.mulf %7, %8 : vector<16x32xf32>
    %c0_11 = arith.constant 0 : index
    %c0_12 = arith.constant 0 : index
    %10 = vector.load %arg6[%c0_11, %c0_12] : memref<32x32xf32, #tpu.memory_space<vmem>>, vector<32x32xf32>
    %cst_13 = arith.constant dense<0.000000e+00> : vector<16x32xf32>
    %11 = tpu.matmul %3, %10, %cst_13 {dimension_numbers = #tpu.dot_dimension_numbers<[1], [0], [0], [1], [0, 0, 1, 1], [], []>} : vector<16x32xf32>, vector<32x32xf32>, vector<16x32xf32> -> vector<16x32xf32>
    %c0_14 = arith.constant 0 : index
    %c0_15 = arith.constant 0 : index
    %12 = vector.load %arg7[%c0_14, %c0_15] : memref<32x32xf32, #tpu.memory_space<vmem>>, vector<32x32xf32>
    %cst_16 = arith.constant dense<0.000000e+00> : vector<16x32xf32>
    %13 = tpu.matmul %5, %12, %cst_16 {dimension_numbers = #tpu.dot_dimension_numbers<[1], [0], [0], [1], [0, 0, 1, 1], [], []>} : vector<16x32xf32>, vector<32x32xf32>, vector<16x32xf32> -> vector<16x32xf32>
    %14 = tpu.iota {dimensions = array<i32: 2>} : vector<2x8x8xi32>
    %c0_17 = arith.constant 0 : index
    %c0_18 = arith.constant 0 : index
    %15 = vector.load %arg1[%c0_17, %c0_18] : memref<2x1xi32, #tpu.memory_space<vmem>>, vector<2x1xi32>
    %16 = vector.shape_cast %15 : vector<2x1xi32> to vector<2x1x1xi32>
    %17 = vector.broadcast %16 : vector<2x1x1xi32> to vector<2x8x8xi32>
    %18 = arith.cmpi slt, %14, %17 : vector<2x8x8xi32>
    %c0_19 = arith.constant 0 : index
    %c0_20 = arith.constant 0 : index
    %19 = vector.load %arg8[%c0_19, %c0_20] : memref<32x32xf32, #tpu.memory_space<vmem>>, vector<32x32xf32>
    %cst_21 = arith.constant 0.000000e+00 : f32
    %20 = vector.broadcast %cst_21 : f32 to vector<16x32xf32>
    %21 = vector.extract_strided_slice %9 {offsets = [0, 0], sizes = [16, 8], strides = [1, 1]} : vector<16x32xf32> to vector<16x8xf32>
    %22 = vector.shape_cast %21 : vector<16x8xf32> to vector<2x8x8xf32>
    %23 = vector.extract_strided_slice %11 {offsets = [0, 0], sizes = [16, 8], strides = [1, 1]} : vector<16x32xf32> to vector<16x8xf32>
    %24 = vector.shape_cast %23 : vector<16x8xf32> to vector<2x8x8xf32>
    %25 = vector.extract_strided_slice %13 {offsets = [0, 0], sizes = [16, 8], strides = [1, 1]} : vector<16x32xf32> to vector<16x8xf32>
    %26 = vector.shape_cast %25 : vector<16x8xf32> to vector<2x8x8xf32>
    "tpu.trace_start"() <{level = 10 : i32, message = "bqd,bkd->bqk"}> : () -> ()
    %cst_22 = arith.constant dense<0.000000e+00> : vector<2x8x8xf32>
    %27 = tpu.matmul %22, %24, %cst_22 {dimension_numbers = #tpu.dot_dimension_numbers<[2], [2], [1], [1], [0, 0, 0, 1, 1, 1], [0], [0]>} : vector<2x8x8xf32>, vector<2x8x8xf32>, vector<2x8x8xf32> -> vector<2x8x8xf32>
    %cst_23 = arith.constant -1.000000e+06 : f32
    "tpu.trace_stop"() : () -> ()
    %28 = vector.broadcast %cst_23 : f32 to vector<2x8x8xf32>
    %29 = arith.select %18, %27, %28 : vector<2x8x8xi1>, vector<2x8x8xf32>
    %cst_24 = arith.constant dense<0xFF800000> : vector<2x8xf32>
    %30 = vector.multi_reduction <maximumf>, %29, %cst_24 [2] : vector<2x8x8xf32> to vector<2x8xf32>
    %31 = vector.shape_cast %30 : vector<2x8xf32> to vector<2x8x1xf32>
    %32 = vector.broadcast %31 : vector<2x8x1xf32> to vector<2x8x8xf32>
    %33 = arith.subf %29, %32 : vector<2x8x8xf32>
    %34 = math.exp %33 : vector<2x8x8xf32>
    %cst_25 = arith.constant dense<0.000000e+00> : vector<2x8xf32>
    %35 = vector.multi_reduction <add>, %34, %cst_25 [2] : vector<2x8x8xf32> to vector<2x8xf32>
    %36 = vector.shape_cast %35 : vector<2x8xf32> to vector<2x8x1xf32>
    %37 = tpu.reciprocal %36 {approx = true} : vector<2x8x1xf32> -> vector<2x8x1xf32>
    %38 = vector.broadcast %37 : vector<2x8x1xf32> to vector<2x8x8xf32>
    %39 = arith.mulf %34, %38 : vector<2x8x8xf32>
    "tpu.trace_start"() <{level = 10 : i32, message = "bqk,bkd->bqd"}> : () -> ()
    %cst_26 = arith.constant dense<0.000000e+00> : vector<2x8x8xf32>
    %40 = tpu.matmul %39, %26, %cst_26 {dimension_numbers = #tpu.dot_dimension_numbers<[2], [1], [1], [2], [0, 0, 0, 1, 1, 2], [0], [0]>} : vector<2x8x8xf32>, vector<2x8x8xf32>, vector<2x8x8xf32> -> vector<2x8x8xf32>
    "tpu.trace_stop"() : () -> ()
    %41 = vector.shape_cast %40 : vector<2x8x8xf32> to vector<16x8xf32>
    %42 = vector.extract_strided_slice %19 {offsets = [0, 0], sizes = [8, 32], strides = [1, 1]} : vector<32x32xf32> to vector<8x32xf32>
    %cst_27 = arith.constant dense<0.000000e+00> : vector<16x32xf32>
    %43 = tpu.matmul %41, %42, %cst_27 {dimension_numbers = #tpu.dot_dimension_numbers<[1], [0], [0], [1], [0, 0, 1, 1], [], []>} : vector<16x8xf32>, vector<8x32xf32>, vector<16x32xf32> -> vector<16x32xf32>
    %44 = arith.addf %20, %43 : vector<16x32xf32>
    %45 = vector.extract_strided_slice %9 {offsets = [0, 8], sizes = [16, 8], strides = [1, 1]} : vector<16x32xf32> to vector<16x8xf32>
    %46 = vector.shape_cast %45 : vector<16x8xf32> to vector<2x8x8xf32>
    %47 = vector.extract_strided_slice %11 {offsets = [0, 8], sizes = [16, 8], strides = [1, 1]} : vector<16x32xf32> to vector<16x8xf32>
    %48 = vector.shape_cast %47 : vector<16x8xf32> to vector<2x8x8xf32>
    %49 = vector.extract_strided_slice %13 {offsets = [0, 8], sizes = [16, 8], strides = [1, 1]} : vector<16x32xf32> to vector<16x8xf32>
    %50 = vector.shape_cast %49 : vector<16x8xf32> to vector<2x8x8xf32>
    "tpu.trace_start"() <{level = 10 : i32, message = "bqd,bkd->bqk"}> : () -> ()
    %cst_28 = arith.constant dense<0.000000e+00> : vector<2x8x8xf32>
    %51 = tpu.matmul %46, %48, %cst_28 {dimension_numbers = #tpu.dot_dimension_numbers<[2], [2], [1], [1], [0, 0, 0, 1, 1, 1], [0], [0]>} : vector<2x8x8xf32>, vector<2x8x8xf32>, vector<2x8x8xf32> -> vector<2x8x8xf32>
    %cst_29 = arith.constant -1.000000e+06 : f32
    "tpu.trace_stop"() : () -> ()
    %52 = vector.broadcast %cst_29 : f32 to vector<2x8x8xf32>
    %53 = arith.select %18, %51, %52 : vector<2x8x8xi1>, vector<2x8x8xf32>
    %cst_30 = arith.constant dense<0xFF800000> : vector<2x8xf32>
    %54 = vector.multi_reduction <maximumf>, %53, %cst_30 [2] : vector<2x8x8xf32> to vector<2x8xf32>
    %55 = vector.shape_cast %54 : vector<2x8xf32> to vector<2x8x1xf32>
    %56 = vector.broadcast %55 : vector<2x8x1xf32> to vector<2x8x8xf32>
    %57 = arith.subf %53, %56 : vector<2x8x8xf32>
    %58 = math.exp %57 : vector<2x8x8xf32>
    %cst_31 = arith.constant dense<0.000000e+00> : vector<2x8xf32>
    %59 = vector.multi_reduction <add>, %58, %cst_31 [2] : vector<2x8x8xf32> to vector<2x8xf32>
    %60 = vector.shape_cast %59 : vector<2x8xf32> to vector<2x8x1xf32>
    %61 = tpu.reciprocal %60 {approx = true} : vector<2x8x1xf32> -> vector<2x8x1xf32>
    %62 = vector.broadcast %61 : vector<2x8x1xf32> to vector<2x8x8xf32>
    %63 = arith.mulf %58, %62 : vector<2x8x8xf32>
    "tpu.trace_start"() <{level = 10 : i32, message = "bqk,bkd->bqd"}> : () -> ()
    %cst_32 = arith.constant dense<0.000000e+00> : vector<2x8x8xf32>
    %64 = tpu.matmul %63, %50, %cst_32 {dimension_numbers = #tpu.dot_dimension_numbers<[2], [1], [1], [2], [0, 0, 0, 1, 1, 2], [0], [0]>} : vector<2x8x8xf32>, vector<2x8x8xf32>, vector<2x8x8xf32> -> vector<2x8x8xf32>
    "tpu.trace_stop"() : () -> ()
    %65 = vector.shape_cast %64 : vector<2x8x8xf32> to vector<16x8xf32>
    %66 = vector.extract_strided_slice %19 {offsets = [8, 0], sizes = [8, 32], strides = [1, 1]} : vector<32x32xf32> to vector<8x32xf32>
    %cst_33 = arith.constant dense<0.000000e+00> : vector<16x32xf32>
    %67 = tpu.matmul %65, %66, %cst_33 {dimension_numbers = #tpu.dot_dimension_numbers<[1], [0], [0], [1], [0, 0, 1, 1], [], []>} : vector<16x8xf32>, vector<8x32xf32>, vector<16x32xf32> -> vector<16x32xf32>
    %68 = arith.addf %44, %67 : vector<16x32xf32>
    %69 = vector.extract_strided_slice %9 {offsets = [0, 16], sizes = [16, 8], strides = [1, 1]} : vector<16x32xf32> to vector<16x8xf32>
    %70 = vector.shape_cast %69 : vector<16x8xf32> to vector<2x8x8xf32>
    %71 = vector.extract_strided_slice %11 {offsets = [0, 16], sizes = [16, 8], strides = [1, 1]} : vector<16x32xf32> to vector<16x8xf32>
    %72 = vector.shape_cast %71 : vector<16x8xf32> to vector<2x8x8xf32>
    %73 = vector.extract_strided_slice %13 {offsets = [0, 16], sizes = [16, 8], strides = [1, 1]} : vector<16x32xf32> to vector<16x8xf32>
    %74 = vector.shape_cast %73 : vector<16x8xf32> to vector<2x8x8xf32>
    "tpu.trace_start"() <{level = 10 : i32, message = "bqd,bkd->bqk"}> : () -> ()
    %cst_34 = arith.constant dense<0.000000e+00> : vector<2x8x8xf32>
    %75 = tpu.matmul %70, %72, %cst_34 {dimension_numbers = #tpu.dot_dimension_numbers<[2], [2], [1], [1], [0, 0, 0, 1, 1, 1], [0], [0]>} : vector<2x8x8xf32>, vector<2x8x8xf32>, vector<2x8x8xf32> -> vector<2x8x8xf32>
    %cst_35 = arith.constant -1.000000e+06 : f32
    "tpu.trace_stop"() : () -> ()
    %76 = vector.broadcast %cst_35 : f32 to vector<2x8x8xf32>
    %77 = arith.select %18, %75, %76 : vector<2x8x8xi1>, vector<2x8x8xf32>
    %cst_36 = arith.constant dense<0xFF800000> : vector<2x8xf32>
    %78 = vector.multi_reduction <maximumf>, %77, %cst_36 [2] : vector<2x8x8xf32> to vector<2x8xf32>
    %79 = vector.shape_cast %78 : vector<2x8xf32> to vector<2x8x1xf32>
    %80 = vector.broadcast %79 : vector<2x8x1xf32> to vector<2x8x8xf32>
    %81 = arith.subf %77, %80 : vector<2x8x8xf32>
    %82 = math.exp %81 : vector<2x8x8xf32>
    %cst_37 = arith.constant dense<0.000000e+00> : vector<2x8xf32>
    %83 = vector.multi_reduction <add>, %82, %cst_37 [2] : vector<2x8x8xf32> to vector<2x8xf32>
    %84 = vector.shape_cast %83 : vector<2x8xf32> to vector<2x8x1xf32>
    %85 = tpu.reciprocal %84 {approx = true} : vector<2x8x1xf32> -> vector<2x8x1xf32>
    %86 = vector.broadcast %85 : vector<2x8x1xf32> to vector<2x8x8xf32>
    %87 = arith.mulf %82, %86 : vector<2x8x8xf32>
    "tpu.trace_start"() <{level = 10 : i32, message = "bqk,bkd->bqd"}> : () -> ()
    %cst_38 = arith.constant dense<0.000000e+00> : vector<2x8x8xf32>
    %88 = tpu.matmul %87, %74, %cst_38 {dimension_numbers = #tpu.dot_dimension_numbers<[2], [1], [1], [2], [0, 0, 0, 1, 1, 2], [0], [0]>} : vector<2x8x8xf32>, vector<2x8x8xf32>, vector<2x8x8xf32> -> vector<2x8x8xf32>
    "tpu.trace_stop"() : () -> ()
    %89 = vector.shape_cast %88 : vector<2x8x8xf32> to vector<16x8xf32>
    %90 = vector.extract_strided_slice %19 {offsets = [16, 0], sizes = [8, 32], strides = [1, 1]} : vector<32x32xf32> to vector<8x32xf32>
    %cst_39 = arith.constant dense<0.000000e+00> : vector<16x32xf32>
    %91 = tpu.matmul %89, %90, %cst_39 {dimension_numbers = #tpu.dot_dimension_numbers<[1], [0], [0], [1], [0, 0, 1, 1], [], []>} : vector<16x8xf32>, vector<8x32xf32>, vector<16x32xf32> -> vector<16x32xf32>
    %92 = arith.addf %68, %91 : vector<16x32xf32>
    %93 = vector.extract_strided_slice %9 {offsets = [0, 24], sizes = [16, 8], strides = [1, 1]} : vector<16x32xf32> to vector<16x8xf32>
    %94 = vector.shape_cast %93 : vector<16x8xf32> to vector<2x8x8xf32>
    %95 = vector.extract_strided_slice %11 {offsets = [0, 24], sizes = [16, 8], strides = [1, 1]} : vector<16x32xf32> to vector<16x8xf32>
    %96 = vector.shape_cast %95 : vector<16x8xf32> to vector<2x8x8xf32>
    %97 = vector.extract_strided_slice %13 {offsets = [0, 24], sizes = [16, 8], strides = [1, 1]} : vector<16x32xf32> to vector<16x8xf32>
    %98 = vector.shape_cast %97 : vector<16x8xf32> to vector<2x8x8xf32>
    "tpu.trace_start"() <{level = 10 : i32, message = "bqd,bkd->bqk"}> : () -> ()
    %cst_40 = arith.constant dense<0.000000e+00> : vector<2x8x8xf32>
    %99 = tpu.matmul %94, %96, %cst_40 {dimension_numbers = #tpu.dot_dimension_numbers<[2], [2], [1], [1], [0, 0, 0, 1, 1, 1], [0], [0]>} : vector<2x8x8xf32>, vector<2x8x8xf32>, vector<2x8x8xf32> -> vector<2x8x8xf32>
    %cst_41 = arith.constant -1.000000e+06 : f32
    "tpu.trace_stop"() : () -> ()
    %100 = vector.broadcast %cst_41 : f32 to vector<2x8x8xf32>
    %101 = arith.select %18, %99, %100 : vector<2x8x8xi1>, vector<2x8x8xf32>
    %cst_42 = arith.constant dense<0xFF800000> : vector<2x8xf32>
    %102 = vector.multi_reduction <maximumf>, %101, %cst_42 [2] : vector<2x8x8xf32> to vector<2x8xf32>
    %103 = vector.shape_cast %102 : vector<2x8xf32> to vector<2x8x1xf32>
    %104 = vector.broadcast %103 : vector<2x8x1xf32> to vector<2x8x8xf32>
    %105 = arith.subf %101, %104 : vector<2x8x8xf32>
    %106 = math.exp %105 : vector<2x8x8xf32>
    %cst_43 = arith.constant dense<0.000000e+00> : vector<2x8xf32>
    %107 = vector.multi_reduction <add>, %106, %cst_43 [2] : vector<2x8x8xf32> to vector<2x8xf32>
    %108 = vector.shape_cast %107 : vector<2x8xf32> to vector<2x8x1xf32>
    %109 = tpu.reciprocal %108 {approx = true} : vector<2x8x1xf32> -> vector<2x8x1xf32>
    %110 = vector.broadcast %109 : vector<2x8x1xf32> to vector<2x8x8xf32>
    %111 = arith.mulf %106, %110 : vector<2x8x8xf32>
    "tpu.trace_start"() <{level = 10 : i32, message = "bqk,bkd->bqd"}> : () -> ()
    %cst_44 = arith.constant dense<0.000000e+00> : vector<2x8x8xf32>
    %112 = tpu.matmul %111, %98, %cst_44 {dimension_numbers = #tpu.dot_dimension_numbers<[2], [1], [1], [2], [0, 0, 0, 1, 1, 2], [0], [0]>} : vector<2x8x8xf32>, vector<2x8x8xf32>, vector<2x8x8xf32> -> vector<2x8x8xf32>
    "tpu.trace_stop"() : () -> ()
    %113 = vector.shape_cast %112 : vector<2x8x8xf32> to vector<16x8xf32>
    %114 = vector.extract_strided_slice %19 {offsets = [24, 0], sizes = [8, 32], strides = [1, 1]} : vector<32x32xf32> to vector<8x32xf32>
    %cst_45 = arith.constant dense<0.000000e+00> : vector<16x32xf32>
    %115 = tpu.matmul %113, %114, %cst_45 {dimension_numbers = #tpu.dot_dimension_numbers<[1], [0], [0], [1], [0, 0, 1, 1], [], []>} : vector<16x8xf32>, vector<8x32xf32>, vector<16x32xf32> -> vector<16x32xf32>
    %116 = arith.addf %92, %115 : vector<16x32xf32>
    %117 = vector.shape_cast %116 : vector<16x32xf32> to vector<2x8x32xf32>
    %c0_46 = arith.constant 0 : index
    %c0_47 = arith.constant 0 : index
    %c0_48 = arith.constant 0 : index
    %118 = vector.load %arg9[%c0_46, %c0_47, %c0_48] : memref<2x8x32xf32, #tpu.memory_space<vmem>>, vector<2x8x32xf32>
    tpu.vector_store %arg9[%c0_46, %c0_47, %c0_48], %117 {strides = array<i32>} : memref<2x8x32xf32, #tpu.memory_space<vmem>>, vector<2x8x32xf32>,
    return
  }
  func.func @transform_0(%arg0: i32) -> (i32, i32) {
    %c0_i32 = arith.constant 0 : i32
    %c0_i32_0 = arith.constant 0 : i32
    return %arg0, %c0_i32 : i32, i32
  }
  func.func @transform_1(%arg0: i32) -> (i32, i32, i32) {
    %c0_i32 = arith.constant 0 : i32
    %c0_i32_0 = arith.constant 0 : i32
    %c0_i32_1 = arith.constant 0 : i32
    return %arg0, %c0_i32, %c0_i32_0 : i32, i32, i32
  }
  func.func @transform_2(%arg0: i32) -> (i32, i32, i32) {
    %c0_i32 = arith.constant 0 : i32
    %c0_i32_0 = arith.constant 0 : i32
    %c0_i32_1 = arith.constant 0 : i32
    return %arg0, %c0_i32, %c0_i32_0 : i32, i32, i32
  }
  func.func @transform_3(%arg0: i32) -> (i32, i32, i32) {
    %c0_i32 = arith.constant 0 : i32
    %c0_i32_0 = arith.constant 0 : i32
    %c0_i32_1 = arith.constant 0 : i32
    return %arg0, %c0_i32, %c0_i32_0 : i32, i32, i32
  }
  func.func @transform_4(%arg0: i32) -> (i32, i32) {
    %c0_i32 = arith.constant 0 : i32
    %c0_i32_0 = arith.constant 0 : i32
    %c0_i32_1 = arith.constant 0 : i32
    return %c0_i32, %c0_i32_0 : i32, i32
  }
  func.func @transform_5(%arg0: i32) -> (i32, i32) {
    %c0_i32 = arith.constant 0 : i32
    %c0_i32_0 = arith.constant 0 : i32
    %c0_i32_1 = arith.constant 0 : i32
    return %c0_i32, %c0_i32_0 : i32, i32
  }
  func.func @transform_6(%arg0: i32) -> (i32, i32) {
    %c0_i32 = arith.constant 0 : i32
    %c0_i32_0 = arith.constant 0 : i32
    %c0_i32_1 = arith.constant 0 : i32
    return %c0_i32, %c0_i32_0 : i32, i32
  }
  func.func @transform_7(%arg0: i32) -> (i32, i32) {
    %c0_i32 = arith.constant 0 : i32
    %c0_i32_0 = arith.constant 0 : i32
    %c0_i32_1 = arith.constant 0 : i32
    return %c0_i32, %c0_i32_0 : i32, i32
  }
  func.func @transform_8(%arg0: i32) -> (i32, i32, i32) {
    %c0_i32 = arith.constant 0 : i32
    %c0_i32_0 = arith.constant 0 : i32
    %c0_i32_1 = arith.constant 0 : i32
    return %arg0, %c0_i32, %c0_i32_0 : i32, i32, i32
  }
}

</mosaic_0001>

<llo_original>
// kernel: tpu_custom_call.1
$region0: #{tpu_custom_call.1}
  #allocation0 [shape = 'u32[]', space=smem, size = 0x4, offset = 0x4, fixed_abs, tag = 'smem constant byte address 0x4 - core index']
  #allocation1 [shape = 'u32[144,128]{1,0:T(1,128)}', space=vmem, size = 0x12000, scoped, tag = 'internal scratch']
  %s0 = inlined_call_operand.vmem [shape: s32[2,1], index: 0, kind: input, shape index: {}]
  %s1 = inlined_call_operand.hbm [shape: f32[2,8,32], index: 1, kind: input, shape index: {}]
  %s2 = inlined_call_operand.hbm [shape: f32[2,8,32], index: 2, kind: input, shape index: {}]
  %s3 = inlined_call_operand.hbm [shape: f32[2,8,32], index: 3, kind: input, shape index: {}]
  %s4 = inlined_call_operand.hbm [shape: f32[32,32], index: 4, kind: input, shape index: {}]
  %s5 = inlined_call_operand.hbm [shape: f32[32,32], index: 5, kind: input, shape index: {}]
  %s6 = inlined_call_operand.hbm [shape: f32[32,32], index: 6, kind: input, shape index: {}]
  %s7 = inlined_call_operand.hbm [shape: f32[32,32], index: 7, kind: input, shape index: {}]
  %s8 = inlined_call_operand.hbm [shape: f32[2,8,32], index: 8, kind: output, shape index: {}]
  %s9 = sld [smem:[#allocation0]]
  $region70: #{tpu_custom_call.1} parent=0
    _
  %s11 = ssub.s32 1, %s9
  %s12 = scalar_select 0, %s11, %s9
  $region1: #{tpu_custom_call.1} parent=0
    #allocation2 [shape = 'u8[8192]{0}', space=vmem, size = 0x2000, scoped, tag = 'input window, operand 1, single buffered']
    #allocation3 [shape = 's32[1]{0}', space=sflag, size = 0x4, scoped, tag = 'scoped memory for tpu_custom_call.1']
    #allocation4 [shape = 's32[1]{0}', space=sflag, size = 0x4, scoped, tag = 'scoped memory for tpu_custom_call.1']
    #allocation5 [shape = 'u8[8192]{0}', space=vmem, size = 0x2000, scoped, tag = 'input window, operand 2, single buffered']
    #allocation6 [shape = 's32[1]{0}', space=sflag, size = 0x4, scoped, tag = 'scoped memory for tpu_custom_call.1']
    #allocation7 [shape = 'u8[8192]{0}', space=vmem, size = 0x2000, scoped, tag = 'input window, operand 3, single buffered']
    #allocation8 [shape = 'u8[16384]{0}', space=vmem, size = 0x4000, scoped, tag = 'input window, operand 4, single buffered']
    #allocation9 [shape = 's32[1]{0}', space=sflag, size = 0x4, scoped, tag = 'scoped memory for tpu_custom_call.1']
    #allocation10 [shape = 'u8[16384]{0}', space=vmem, size = 0x4000, scoped, tag = 'input window, operand 5, single buffered']
    #allocation11 [shape = 'u8[16384]{0}', space=vmem, size = 0x4000, scoped, tag = 'input window, operand 6, single buffered']
    #allocation12 [shape = 's32[1]{0}', space=sflag, size = 0x4, scoped, tag = 'scoped memory for tpu_custom_call.1']
    #allocation13 [shape = 'u8[16384]{0}', space=vmem, size = 0x4000, scoped, tag = 'input window, operand 7, single buffered']
    #allocation14 [shape = 'u8[8192]{0}', space=vmem, size = 0x2000, scoped, tag = 'output window, operand 0, single buffered']
    %13 = vsyncpa [#allocation3], 0
    %14 = vsyncpa [#allocation6], 0
    %15 = vsyncpa [#allocation9], 0
    %16 = vsyncpa [#allocation12], 0
    %17 = vsyncpa [#allocation4], 0
    // Predicated region
    $region2: #{tpu_custom_call.1} parent=1 // pred_check
      _
    $region3: #{tpu_custom_call.1} parent=1 // pred_check_branch
      %19 = sbr.rel (0) target = $region5
    $region4: #{tpu_custom_call.1} parent=1 // pred_region
      _
    $region5: #{tpu_custom_call.1} parent=1 // pred_fallthru
      _
    // Predicated region
    $region6: #{tpu_custom_call.1} parent=1 // pred_check
      _
    $region7: #{tpu_custom_call.1} parent=1 // pred_check_branch
      %21 = sbr.rel (0) target = $region9
    $region8: #{tpu_custom_call.1} parent=1 // pred_region
      %s23 = ssub.s32 256, 256
      %24 = vsyncadd [#allocation3], %s23
      %s25 = sshll.u32 [#allocation2], 4
      %s26 = int_to_ptr.vmem [resolvable:$true] %s25
      %31 = dma.hbm_to_vmem [thread:$0]  %s1, 256, %s26, [#allocation3], 128, 128, 8
    $region9: #{tpu_custom_call.1} parent=1 // pred_fallthru
      _
    // Predicated region
    $region10: #{tpu_custom_call.1} parent=1 // pred_check
      _
    $region11: #{tpu_custom_call.1} parent=1 // pred_check_branch
      %33 = sbr.rel (0) target = $region13
    $region12: #{tpu_custom_call.1} parent=1 // pred_region
      %s35 = ssub.s32 256, 256
      %36 = vsyncadd [#allocation6], %s35
      %s37 = sshll.u32 [#allocation5], 4
      %s38 = int_to_ptr.vmem [resolvable:$true] %s37
      %43 = dma.hbm_to_vmem [thread:$0]  %s2, 256, %s38, [#allocation6], 128, 128, 8
    $region13: #{tpu_custom_call.1} parent=1 // pred_fallthru
      _
    // Predicated region
    $region14: #{tpu_custom_call.1} parent=1 // pred_check
      _
    $region15: #{tpu_custom_call.1} parent=1 // pred_check_branch
      %45 = sbr.rel (0) target = $region17
    $region16: #{tpu_custom_call.1} parent=1 // pred_region
      %s47 = ssub.s32 256, 256
      %48 = vsyncadd [#allocation6], %s47
      %s49 = sshll.u32 [#allocation7], 4
      %s50 = int_to_ptr.vmem [resolvable:$true] %s49
      %55 = dma.hbm_to_vmem [thread:$0]  %s3, 256, %s50, [#allocation6], 128, 128, 8
    $region17: #{tpu_custom_call.1} parent=1 // pred_fallthru
      _
    // Predicated region
    $region18: #{tpu_custom_call.1} parent=1 // pred_check
      _
    $region19: #{tpu_custom_call.1} parent=1 // pred_check_branch
      %57 = sbr.rel (0) target = $region21
    $region20: #{tpu_custom_call.1} parent=1 // pred_region
      %s59 = ssub.s32 512, 512
      %60 = vsyncadd [#allocation9], %s59
      %s61 = sshll.u32 [#allocation8], 4
      %s62 = int_to_ptr.vmem [resolvable:$true] %s61
      %67 = dma.hbm_to_vmem [thread:$0]  %s4, 512, %s62, [#allocation9], 128, 128, 8
    $region21: #{tpu_custom_call.1} parent=1 // pred_fallthru
      _
    // Predicated region
    $region22: #{tpu_custom_call.1} parent=1 // pred_check
      _
    $region23: #{tpu_custom_call.1} parent=1 // pred_check_branch
      %69 = sbr.rel (0) target = $region25
    $region24: #{tpu_custom_call.1} parent=1 // pred_region
      %s71 = ssub.s32 512, 512
      %72 = vsyncadd [#allocation9], %s71
      %s73 = sshll.u32 [#allocation10], 4
      %s74 = int_to_ptr.vmem [resolvable:$true] %s73
      %79 = dma.hbm_to_vmem [thread:$0]  %s5, 512, %s74, [#allocation9], 128, 128, 8
    $region25: #{tpu_custom_call.1} parent=1 // pred_fallthru
      _
    // Predicated region
    $region26: #{tpu_custom_call.1} parent=1 // pred_check
      _
    $region27: #{tpu_custom_call.1} parent=1 // pred_check_branch
      %81 = sbr.rel (0) target = $region29
    $region28: #{tpu_custom_call.1} parent=1 // pred_region
      %s83 = ssub.s32 512, 512
      %84 = vsyncadd [#allocation12], %s83
      %s85 = sshll.u32 [#allocation11], 4
      %s86 = int_to_ptr.vmem [resolvable:$true] %s85
      %91 = dma.hbm_to_vmem [thread:$0]  %s6, 512, %s86, [#allocation12], 128, 128, 8
    $region29: #{tpu_custom_call.1} parent=1 // pred_fallthru
      _
    // Predicated region
    $region30: #{tpu_custom_call.1} parent=1 // pred_check
      _
    $region31: #{tpu_custom_call.1} parent=1 // pred_check_branch
      %93 = sbr.rel (0) target = $region33
    $region32: #{tpu_custom_call.1} parent=1 // pred_region
      %s95 = ssub.s32 512, 512
      %96 = vsyncadd [#allocation12], %s95
      %s97 = sshll.u32 [#allocation13], 4
      %s98 = int_to_ptr.vmem [resolvable:$true] %s97
      %103 = dma.hbm_to_vmem [thread:$0]  %s7, 512, %s98, [#allocation12], 128, 128, 8
    $region33: #{tpu_custom_call.1} parent=1 // pred_fallthru
      _
    // Predicated region
    $region34: #{tpu_custom_call.1} parent=1 // pred_check
      _
    $region35: #{tpu_custom_call.1} parent=1 // pred_check_branch
      %105 = sbr.rel (0) target = $region37
    $region36: #{tpu_custom_call.1} parent=1 // pred_region
      %106 = dma.done [#allocation3], 256
    $region37: #{tpu_custom_call.1} parent=1 // pred_fallthru
      _
    // Predicated region
    $region38: #{tpu_custom_call.1} parent=1 // pred_check
      _
    $region39: #{tpu_custom_call.1} parent=1 // pred_check_branch
      %108 = sbr.rel (0) target = $region41
    $region40: #{tpu_custom_call.1} parent=1 // pred_region
      %109 = dma.done [#allocation6], 256
    $region41: #{tpu_custom_call.1} parent=1 // pred_fallthru
      _
    // Predicated region
    $region42: #{tpu_custom_call.1} parent=1 // pred_check
      _
    $region43: #{tpu_custom_call.1} parent=1 // pred_check_branch
      %111 = sbr.rel (0) target = $region45
    $region44: #{tpu_custom_call.1} parent=1 // pred_region
      %112 = dma.done [#allocation6], 256
    $region45: #{tpu_custom_call.1} parent=1 // pred_fallthru
      _
    // Predicated region
    $region46: #{tpu_custom_call.1} parent=1 // pred_check
      _
    $region47: #{tpu_custom_call.1} parent=1 // pred_check_branch
      %114 = sbr.rel (0) target = $region49
    $region48: #{tpu_custom_call.1} parent=1 // pred_region
      %115 = dma.done [#allocation9], 512
    $region49: #{tpu_custom_call.1} parent=1 // pred_fallthru
      _
    // Predicated region
    $region50: #{tpu_custom_call.1} parent=1 // pred_check
      _
    $region51: #{tpu_custom_call.1} parent=1 // pred_check_branch
      %117 = sbr.rel (0) target = $region53
    $region52: #{tpu_custom_call.1} parent=1 // pred_region
      %118 = dma.done [#allocation9], 512
    $region53: #{tpu_custom_call.1} parent=1 // pred_fallthru
      _
    // Predicated region
    $region54: #{tpu_custom_call.1} parent=1 // pred_check
      _
    $region55: #{tpu_custom_call.1} parent=1 // pred_check_branch
      %120 = sbr.rel (0) target = $region57
    $region56: #{tpu_custom_call.1} parent=1 // pred_region
      %121 = dma.done [#allocation12], 512
    $region57: #{tpu_custom_call.1} parent=1 // pred_fallthru
      _
    // Predicated region
    $region58: #{tpu_custom_call.1} parent=1 // pred_check
      _
    $region59: #{tpu_custom_call.1} parent=1 // pred_check_branch
      %123 = sbr.rel (0) target = $region61
    $region60: #{tpu_custom_call.1} parent=1 // pred_region
      %124 = dma.done [#allocation12], 512
    $region61: #{tpu_custom_call.1} parent=1 // pred_fallthru
      _
    %v125 = vld [vmem:[#allocation2] sm:$0xff]
    %v126 = vld [vmem:[#allocation2 + $0x8] sm:$0xff]
    %v127 = vld [vmem:[#allocation5] sm:$0xff]
    %v128 = vld [vmem:[#allocation5 + $0x8] sm:$0xff]
    %v129 = vld [vmem:[#allocation7] sm:$0xff]
    %v130 = vld [vmem:[#allocation7 + $0x8] sm:$0xff]
    %v131 = vld [vmem:[#allocation8] sm:$0xff]
    %v132 = vld [vmem:[#allocation8 + $0x8] sm:$0xff]
    %v133 = vld [vmem:[#allocation8 + $0x10] sm:$0xff]
    %v134 = vld [vmem:[#allocation8 + $0x18] sm:$0xff]
    %vm135 = vcmask 261120
    %v137 = vsel %vm135, %v125, 0
    %v140 = vsel %vm135, %v126, 0
    %142 = vmatprep.subr.mxu0 0.0
    %143 = vmatpush1.msra.mxu0 %v131
    %144 = vmatprep.subr.mxu0 0.0
    %145 = vmatpush1.msra.mxu0 %v132
    %146 = vmatprep.subr.mxu0 0.0
    %147 = vmatpush1.msra.mxu0 %v133
    %148 = vmatprep.subr.mxu0 0.0
    %149 = vmatpush1.msra.mxu0 %v134
    %150 = vmatprep.subr.mxu0 0.0
    %151 = vmatpush1.msra.mxu0 0.0
    %152 = vmatprep.subr.mxu0 0.0
    %153 = vmatpush1.msra.mxu0 0.0
    %154 = vmatprep.subr.mxu0 0.0
    %155 = vmatpush1.msra.mxu0 0.0
    %156 = vmatprep.subr.mxu0 0.0
    %157 = vmatpush1.msra.mxu0 0.0
    %158 = vmatprep.subr.mxu0 0.0
    %159 = vmatpush1.msra.mxu0 0.0
    %160 = vmatprep.subr.mxu0 0.0
    %161 = vmatpush1.msra.mxu0 0.0
    %162 = vmatprep.subr.mxu0 0.0
    %163 = vmatpush1.msra.mxu0 0.0
    %164 = vmatprep.subr.mxu0 0.0
    %165 = vmatpush1.msra.mxu0 0.0
    %166 = vmatprep.subr.mxu0 0.0
    %167 = vmatpush1.msra.mxu0 0.0
    %168 = vmatprep.subr.mxu0 0.0
    %169 = vmatpush1.msra.mxu0 0.0
    %170 = vmatprep.subr.mxu0 0.0
    %171 = vmatpush1.msra.mxu0 0.0
    %172 = vmatprep.subr.mxu0 0.0
    %173 = vmatpush1.msra.mxu0 0.0
    %174 = vmatprep.subr.mxu0 0.0
    %175 = vmatpush1.msra.mxu0 0.0
    %176 = vmatprep.subr.mxu0 0.0
    %177 = vmatpush1.msra.mxu0 0.0
    %178 = vmatprep.subr.mxu0 0.0
    %179 = vmatpush1.msra.mxu0 0.0
    %180 = vmatprep.subr.mxu0 0.0
    %181 = vmatpush1.msra.mxu0 0.0
    %182 = vmatprep.subr.mxu0 0.0
    %183 = vmatpush1.msra.mxu0 0.0
    %184 = vmatprep.subr.mxu0 0.0
    %185 = vmatpush1.msra.mxu0 0.0
    %186 = vmatprep.subr.mxu0 0.0
    %187 = vmatpush1.msra.mxu0 0.0
    %188 = vmatprep.subr.mxu0 0.0
    %189 = vmatpush1.msra.mxu0 0.0
    %190 = vmatprep.subr.mxu0 0.0
    %191 = vmatpush1.msra.mxu0 0.0
    %192 = vmatprep.subr.mxu0 0.0
    %193 = vmatpush1.msra.mxu0 0.0
    %194 = vmatprep.subr.mxu0 0.0
    %195 = vmatpush1.msra.mxu0 0.0
    %196 = vmatprep.subr.mxu0 0.0
    %197 = vmatpush1.msra.mxu0 0.0
    %198 = vmatprep.subr.mxu0 0.0
    %199 = vmatpush1.msra.mxu0 0.0
    %200 = vmatprep.subr.mxu0 0.0
    %201 = vmatpush1.msra.mxu0 0.0
    %202 = vmatprep.subr.mxu0 0.0
    %203 = vmatpush1.msra.mxu0 0.0
    %204 = vmatprep.subr.mxu0 0.0
    %205 = vmatpush1.msra.mxu0 0.0
    %206 = vmatprep.mubr.f32.mxu0 0.0
    %207 = vmatmul.mubr.f32.gmra.mrb[0].mxu0 %v137
    %v208 = vpop.f32.mrb[0].mxu0
    %v209 = vadd.f32 0.0, %v208
    %v210 = vpop.f32.mrb[0].mxu0
    %211 = vmatprep.mubr.f32.mxu0 0.0
    %212 = vmatmul.mubr.f32.gmra.mrb[0].mxu0 %v140
    %v213 = vpop.f32.mrb[0].mxu0
    %v214 = vadd.f32 0.0, %v213
    %v215 = vpop.f32.mrb[0].mxu0
    %216 = vdwg.mxu0
    %v217 = vmul.f32 %v209, 0.35355338
    %v218 = vmul.f32 %v214, 0.35355338
    %v219 = vld [vmem:[#allocation10] sm:$0xff]
    %v220 = vld [vmem:[#allocation10 + $0x8] sm:$0xff]
    %v221 = vld [vmem:[#allocation10 + $0x10] sm:$0xff]
    %v222 = vld [vmem:[#allocation10 + $0x18] sm:$0xff]
    %v224 = vsel %vm135, %v127, 0
    %v227 = vsel %vm135, %v128, 0
    %229 = vmatprep.subr.mxu0 0.0
    %230 = vmatpush1.msra.mxu0 %v219
    %231 = vmatprep.subr.mxu0 0.0
    %232 = vmatpush1.msra.mxu0 %v220
    %233 = vmatprep.subr.mxu0 0.0
    %234 = vmatpush1.msra.mxu0 %v221
    %235 = vmatprep.subr.mxu0 0.0
    %236 = vmatpush1.msra.mxu0 %v222
    %237 = vmatprep.subr.mxu0 0.0
    %238 = vmatpush1.msra.mxu0 0.0
    %239 = vmatprep.subr.mxu0 0.0
    %240 = vmatpush1.msra.mxu0 0.0
    %241 = vmatprep.subr.mxu0 0.0
    %242 = vmatpush1.msra.mxu0 0.0
    %243 = vmatprep.subr.mxu0 0.0
    %244 = vmatpush1.msra.mxu0 0.0
    %245 = vmatprep.subr.mxu0 0.0
    %246 = vmatpush1.msra.mxu0 0.0
    %247 = vmatprep.subr.mxu0 0.0
    %248 = vmatpush1.msra.mxu0 0.0
    %249 = vmatprep.subr.mxu0 0.0
    %250 = vmatpush1.msra.mxu0 0.0
    %251 = vmatprep.subr.mxu0 0.0
    %252 = vmatpush1.msra.mxu0 0.0
    %253 = vmatprep.subr.mxu0 0.0
    %254 = vmatpush1.msra.mxu0 0.0
    %255 = vmatprep.subr.mxu0 0.0
    %256 = vmatpush1.msra.mxu0 0.0
    %257 = vmatprep.subr.mxu0 0.0
    %258 = vmatpush1.msra.mxu0 0.0
    %259 = vmatprep.subr.mxu0 0.0
    %260 = vmatpush1.msra.mxu0 0.0
    %261 = vmatprep.subr.mxu0 0.0
    %262 = vmatpush1.msra.mxu0 0.0
    %263 = vmatprep.subr.mxu0 0.0
    %264 = vmatpush1.msra.mxu0 0.0
    %265 = vmatprep.subr.mxu0 0.0
    %266 = vmatpush1.msra.mxu0 0.0
    %267 = vmatprep.subr.mxu0 0.0
    %268 = vmatpush1.msra.mxu0 0.0
    %269 = vmatprep.subr.mxu0 0.0
    %270 = vmatpush1.msra.mxu0 0.0
    %271 = vmatprep.subr.mxu0 0.0
    %272 = vmatpush1.msra.mxu0 0.0
    %273 = vmatprep.subr.mxu0 0.0
    %274 = vmatpush1.msra.mxu0 0.0
    %275 = vmatprep.subr.mxu0 0.0
    %276 = vmatpush1.msra.mxu0 0.0
    %277 = vmatprep.subr.mxu0 0.0
    %278 = vmatpush1.msra.mxu0 0.0
    %279 = vmatprep.subr.mxu0 0.0
    %280 = vmatpush1.msra.mxu0 0.0
    %281 = vmatprep.subr.mxu0 0.0
    %282 = vmatpush1.msra.mxu0 0.0
    %283 = vmatprep.subr.mxu0 0.0
    %284 = vmatpush1.msra.mxu0 0.0
    %285 = vmatprep.subr.mxu0 0.0
    %286 = vmatpush1.msra.mxu0 0.0
    %287 = vmatprep.subr.mxu0 0.0
    %288 = vmatpush1.msra.mxu0 0.0
    %289 = vmatprep.subr.mxu0 0.0
    %290 = vmatpush1.msra.mxu0 0.0
    %291 = vmatprep.subr.mxu0 0.0
    %292 = vmatpush1.msra.mxu0 0.0
    %293 = vmatprep.mubr.f32.mxu0 0.0
    %294 = vmatmul.mubr.f32.gmra.mrb[0].mxu0 %v224
    %v295 = vpop.f32.mrb[0].mxu0
    %v296 = vadd.f32 0.0, %v295
    %v297 = vpop.f32.mrb[0].mxu0
    %298 = vmatprep.mubr.f32.mxu0 0.0
    %299 = vmatmul.mubr.f32.gmra.mrb[0].mxu0 %v227
    %v300 = vpop.f32.mrb[0].mxu0
    %v301 = vadd.f32 0.0, %v300
    %v302 = vpop.f32.mrb[0].mxu0
    %303 = vdwg.mxu0
    %v304 = vld [vmem:[#allocation11] sm:$0xff]
    %v305 = vld [vmem:[#allocation11 + $0x8] sm:$0xff]
    %v306 = vld [vmem:[#allocation11 + $0x10] sm:$0xff]
    %v307 = vld [vmem:[#allocation11 + $0x18] sm:$0xff]
    %v309 = vsel %vm135, %v129, 0
    %v312 = vsel %vm135, %v130, 0
    %314 = vmatprep.subr.mxu0 0.0
    %315 = vmatpush1.msra.mxu0 %v304
    %316 = vmatprep.subr.mxu0 0.0
    %317 = vmatpush1.msra.mxu0 %v305
    %318 = vmatprep.subr.mxu0 0.0
    %319 = vmatpush1.msra.mxu0 %v306
    %320 = vmatprep.subr.mxu0 0.0
    %321 = vmatpush1.msra.mxu0 %v307
    %322 = vmatprep.subr.mxu0 0.0
    %323 = vmatpush1.msra.mxu0 0.0
    %324 = vmatprep.subr.mxu0 0.0
    %325 = vmatpush1.msra.mxu0 0.0
    %326 = vmatprep.subr.mxu0 0.0
    %327 = vmatpush1.msra.mxu0 0.0
    %328 = vmatprep.subr.mxu0 0.0
    %329 = vmatpush1.msra.mxu0 0.0
    %330 = vmatprep.subr.mxu0 0.0
    %331 = vmatpush1.msra.mxu0 0.0
    %332 = vmatprep.subr.mxu0 0.0
    %333 = vmatpush1.msra.mxu0 0.0
    %334 = vmatprep.subr.mxu0 0.0
    %335 = vmatpush1.msra.mxu0 0.0
    %336 = vmatprep.subr.mxu0 0.0
    %337 = vmatpush1.msra.mxu0 0.0
    %338 = vmatprep.subr.mxu0 0.0
    %339 = vmatpush1.msra.mxu0 0.0
    %340 = vmatprep.subr.mxu0 0.0
    %341 = vmatpush1.msra.mxu0 0.0
    %342 = vmatprep.subr.mxu0 0.0
    %343 = vmatpush1.msra.mxu0 0.0
    %344 = vmatprep.subr.mxu0 0.0
    %345 = vmatpush1.msra.mxu0 0.0
    %346 = vmatprep.subr.mxu0 0.0
    %347 = vmatpush1.msra.mxu0 0.0
    %348 = vmatprep.subr.mxu0 0.0
    %349 = vmatpush1.msra.mxu0 0.0
    %350 = vmatprep.subr.mxu0 0.0
    %351 = vmatpush1.msra.mxu0 0.0
    %352 = vmatprep.subr.mxu0 0.0
    %353 = vmatpush1.msra.mxu0 0.0
    %354 = vmatprep.subr.mxu0 0.0
    %355 = vmatpush1.msra.mxu0 0.0
    %356 = vmatprep.subr.mxu0 0.0
    %357 = vmatpush1.msra.mxu0 0.0
    %358 = vmatprep.subr.mxu0 0.0
    %359 = vmatpush1.msra.mxu0 0.0
    %360 = vmatprep.subr.mxu0 0.0
    %361 = vmatpush1.msra.mxu0 0.0
    %362 = vmatprep.subr.mxu0 0.0
    %363 = vmatpush1.msra.mxu0 0.0
    %364 = vmatprep.subr.mxu0 0.0
    %365 = vmatpush1.msra.mxu0 0.0
    %366 = vmatprep.subr.mxu0 0.0
    %367 = vmatpush1.msra.mxu0 0.0
    %368 = vmatprep.subr.mxu0 0.0
    %369 = vmatpush1.msra.mxu0 0.0
    %370 = vmatprep.subr.mxu0 0.0
    %371 = vmatpush1.msra.mxu0 0.0
    %372 = vmatprep.subr.mxu0 0.0
    %373 = vmatpush1.msra.mxu0 0.0
    %374 = vmatprep.subr.mxu0 0.0
    %375 = vmatpush1.msra.mxu0 0.0
    %376 = vmatprep.subr.mxu0 0.0
    %377 = vmatpush1.msra.mxu0 0.0
    %378 = vmatprep.mubr.f32.mxu0 0.0
    %379 = vmatmul.mubr.f32.gmra.mrb[0].mxu0 %v309
    %v380 = vpop.f32.mrb[0].mxu0
    %v381 = vadd.f32 0.0, %v380
    %v382 = vpop.f32.mrb[0].mxu0
    %383 = vmatprep.mubr.f32.mxu0 0.0
    %384 = vmatmul.mubr.f32.gmra.mrb[0].mxu0 %v312
    %v385 = vpop.f32.mrb[0].mxu0
    %v386 = vadd.f32 0.0, %v385
    %v387 = vpop.f32.mrb[0].mxu0
    %388 = vdwg.mxu0
    %v389 = vlaneseq
    %v390 = vand.u32 %v389, 127
    %v391 = vld [vmem:[%s0] sm:$0x3]
    %v393 = vunpack.c.l.s4 1966171168
    %v394 = vunpack.c.0.s8 %v393
    %v395 = vlaneseq
    %v396 = vshrl.u32 %v395, 7
    %v397 = vsub.s32 %v394, %v396
    %v398 = vrot.slane %v391, %v397
    %v399 = vcombine.high %v398, %v398
    %v401 = vunpack.c.l.s4 1966171168
    %v402 = vunpack.c.0.s8 %v401
    %v403 = vlaneseq
    %v404 = vshrl.u32 %v403, 7
    %v405 = vsub.s32 %v402, %v404
    %v406 = vrot.slane %v398, %v405
    %v408 = vunpack.c.l.s4 1966171168
    %v409 = vunpack.c.0.s8 %v408
    %v410 = vlaneseq
    %v411 = vshrl.u32 %v410, 7
    %v412 = vsub.s32 %v409, %v411
    %v413 = vrot.slane %v399, %v412
    %v414 = vlaneseq
    %v415 = vshrl.u32 %v414, 7
    %v416 = vsub.s32 0, %v415
    %v417 = vrot.slane %v406, %v416
    %v418 = vlaneseq
    %v419 = vshrl.u32 %v418, 7
    %v420 = vsub.s32 0, %v419
    %v421 = vrot.slane %v413, %v420
    %422 = vset.pattern.permute.xlu0 0
    %423 = vperm.xlu0 %422, %v417
    %v424 = vpop.permute.xlu0 %423
    %425 = vset.pattern.permute.xlu0 0
    %426 = vperm.xlu0 %425, %v421
    %v427 = vpop.permute.xlu0 %426
    %vm428 = vcmp.lt.s32.totalorder %v390, %v424
    %vm429 = vcmp.lt.s32.totalorder %v390, %v427
    %v430 = vld [vmem:[#allocation13] sm:$0xff]
    %v431 = vld [vmem:[#allocation13 + $0x8] sm:$0xff]
    %v432 = vld [vmem:[#allocation13 + $0x10] sm:$0xff]
    %v433 = vld [vmem:[#allocation13 + $0x18] sm:$0xff]
    %vm434 = vcmask 64512
    %v436 = vsel %vm434, %v217, 0
    %v439 = vsel %vm434, %v296, 0
    %441 = vmatprep.subr.mxu0 0.0
    %442 = vmatpush1.xpose.msra.mxu0 %v439
    %443 = vmatprep.subr.mxu0 0.0
    %444 = vmatpush1.xpose.msra.mxu0 0.0
    %445 = vmatprep.subr.mxu0 0.0
    %446 = vmatpush1.xpose.msra.mxu0 0.0
    %447 = vmatprep.subr.mxu0 0.0
    %448 = vmatpush1.xpose.msra.mxu0 0.0
    %449 = vmatprep.subr.mxu0 0.0
    %450 = vmatpush1.xpose.msra.mxu0 0.0
    %451 = vmatprep.subr.mxu0 0.0
    %452 = vmatpush1.xpose.msra.mxu0 0.0
    %453 = vmatprep.subr.mxu0 0.0
    %454 = vmatpush1.xpose.msra.mxu0 0.0
    %455 = vmatprep.subr.mxu0 0.0
    %456 = vmatpush1.xpose.msra.mxu0 0.0
    %457 = vmatprep.subr.mxu0 0.0
    %458 = vmatpush1.xpose.msra.mxu0 0.0
    %459 = vmatprep.subr.mxu0 0.0
    %460 = vmatpush1.xpose.msra.mxu0 0.0
    %461 = vmatprep.subr.mxu0 0.0
    %462 = vmatpush1.xpose.msra.mxu0 0.0
    %463 = vmatprep.subr.mxu0 0.0
    %464 = vmatpush1.xpose.msra.mxu0 0.0
    %465 = vmatprep.subr.mxu0 0.0
    %466 = vmatpush1.xpose.msra.mxu0 0.0
    %467 = vmatprep.subr.mxu0 0.0
    %468 = vmatpush1.xpose.msra.mxu0 0.0
    %469 = vmatprep.subr.mxu0 0.0
    %470 = vmatpush1.xpose.msra.mxu0 0.0
    %471 = vmatprep.subr.mxu0 0.0
    %472 = vmatpush1.xpose.msra.mxu0 0.0
    %473 = vmatprep.subr.mxu0 0.0
    %474 = vmatpush1.xpose.msra.mxu0 0.0
    %475 = vmatprep.subr.mxu0 0.0
    %476 = vmatpush1.xpose.msra.mxu0 0.0
    %477 = vmatprep.subr.mxu0 0.0
    %478 = vmatpush1.xpose.msra.mxu0 0.0
    %479 = vmatprep.subr.mxu0 0.0
    %480 = vmatpush1.xpose.msra.mxu0 0.0
    %481 = vmatprep.subr.mxu0 0.0
    %482 = vmatpush1.xpose.msra.mxu0 0.0
    %483 = vmatprep.subr.mxu0 0.0
    %484 = vmatpush1.xpose.msra.mxu0 0.0
    %485 = vmatprep.subr.mxu0 0.0
    %486 = vmatpush1.xpose.msra.mxu0 0.0
    %487 = vmatprep.subr.mxu0 0.0
    %488 = vmatpush1.xpose.msra.mxu0 0.0
    %489 = vmatprep.subr.mxu0 0.0
    %490 = vmatpush1.xpose.msra.mxu0 0.0
    %491 = vmatprep.subr.mxu0 0.0
    %492 = vmatpush1.xpose.msra.mxu0 0.0
    %493 = vmatprep.subr.mxu0 0.0
    %494 = vmatpush1.xpose.msra.mxu0 0.0
    %495 = vmatprep.subr.mxu0 0.0
    %496 = vmatpush1.xpose.msra.mxu0 0.0
    %497 = vmatprep.subr.mxu0 0.0
    %498 = vmatpush1.xpose.msra.mxu0 0.0
    %499 = vmatprep.subr.mxu0 0.0
    %500 = vmatpush1.xpose.msra.mxu0 0.0
    %501 = vmatprep.subr.mxu0 0.0
    %502 = vmatpush1.xpose.msra.mxu0 0.0
    %503 = vmatprep.subr.mxu0 0.0
    %504 = vmatpush1.xpose.msra.mxu0 0.0
    %505 = vmatprep.mubr.f32.mxu0 0.0
    %506 = vmatmul.mubr.f32.gmra.mrb[0].mxu0 %v436
    %v507 = vpop.f32.mrb[0].mxu0
    %v508 = vadd.f32 0.0, %v507
    %v509 = vpop.f32.mrb[0].mxu0
    %510 = vdwg.mxu0
    %v512 = vsel %vm434, %v218, 0
    %v515 = vsel %vm434, %v301, 0
    %517 = vmatprep.subr.mxu0 0.0
    %518 = vmatpush1.xpose.msra.mxu0 %v515
    %519 = vmatprep.subr.mxu0 0.0
    %520 = vmatpush1.xpose.msra.mxu0 0.0
    %521 = vmatprep.subr.mxu0 0.0
    %522 = vmatpush1.xpose.msra.mxu0 0.0
    %523 = vmatprep.subr.mxu0 0.0
    %524 = vmatpush1.xpose.msra.mxu0 0.0
    %525 = vmatprep.subr.mxu0 0.0
    %526 = vmatpush1.xpose.msra.mxu0 0.0
    %527 = vmatprep.subr.mxu0 0.0
    %528 = vmatpush1.xpose.msra.mxu0 0.0
    %529 = vmatprep.subr.mxu0 0.0
    %530 = vmatpush1.xpose.msra.mxu0 0.0
    %531 = vmatprep.subr.mxu0 0.0
    %532 = vmatpush1.xpose.msra.mxu0 0.0
    %533 = vmatprep.subr.mxu0 0.0
    %534 = vmatpush1.xpose.msra.mxu0 0.0
    %535 = vmatprep.subr.mxu0 0.0
    %536 = vmatpush1.xpose.msra.mxu0 0.0
    %537 = vmatprep.subr.mxu0 0.0
    %538 = vmatpush1.xpose.msra.mxu0 0.0
    %539 = vmatprep.subr.mxu0 0.0
    %540 = vmatpush1.xpose.msra.mxu0 0.0
    %541 = vmatprep.subr.mxu0 0.0
    %542 = vmatpush1.xpose.msra.mxu0 0.0
    %543 = vmatprep.subr.mxu0 0.0
    %544 = vmatpush1.xpose.msra.mxu0 0.0
    %545 = vmatprep.subr.mxu0 0.0
    %546 = vmatpush1.xpose.msra.mxu0 0.0
    %547 = vmatprep.subr.mxu0 0.0
    %548 = vmatpush1.xpose.msra.mxu0 0.0
    %549 = vmatprep.subr.mxu0 0.0
    %550 = vmatpush1.xpose.msra.mxu0 0.0
    %551 = vmatprep.subr.mxu0 0.0
    %552 = vmatpush1.xpose.msra.mxu0 0.0
    %553 = vmatprep.subr.mxu0 0.0
    %554 = vmatpush1.xpose.msra.mxu0 0.0
    %555 = vmatprep.subr.mxu0 0.0
    %556 = vmatpush1.xpose.msra.mxu0 0.0
    %557 = vmatprep.subr.mxu0 0.0
    %558 = vmatpush1.xpose.msra.mxu0 0.0
    %559 = vmatprep.subr.mxu0 0.0
    %560 = vmatpush1.xpose.msra.mxu0 0.0
    %561 = vmatprep.subr.mxu0 0.0
    %562 = vmatpush1.xpose.msra.mxu0 0.0
    %563 = vmatprep.subr.mxu0 0.0
    %564 = vmatpush1.xpose.msra.mxu0 0.0
    %565 = vmatprep.subr.mxu0 0.0
    %566 = vmatpush1.xpose.msra.mxu0 0.0
    %567 = vmatprep.subr.mxu0 0.0
    %568 = vmatpush1.xpose.msra.mxu0 0.0
    %569 = vmatprep.subr.mxu0 0.0
    %570 = vmatpush1.xpose.msra.mxu0 0.0
    %571 = vmatprep.subr.mxu0 0.0
    %572 = vmatpush1.xpose.msra.mxu0 0.0
    %573 = vmatprep.subr.mxu0 0.0
    %574 = vmatpush1.xpose.msra.mxu0 0.0
    %575 = vmatprep.subr.mxu0 0.0
    %576 = vmatpush1.xpose.msra.mxu0 0.0
    %577 = vmatprep.subr.mxu0 0.0
    %578 = vmatpush1.xpose.msra.mxu0 0.0
    %579 = vmatprep.subr.mxu0 0.0
    %580 = vmatpush1.xpose.msra.mxu0 0.0
    %581 = vmatprep.mubr.f32.mxu0 0.0
    %582 = vmatmul.mubr.f32.gmra.mrb[0].mxu0 %v512
    %v583 = vpop.f32.mrb[0].mxu0
    %v584 = vadd.f32 0.0, %v583
    %v585 = vpop.f32.mrb[0].mxu0
    %586 = vdwg.mxu0
    %v587 = vsel %vm428, %v508, -1000000.0
    %v588 = vsel %vm429, %v584, -1000000.0
    %v589 = vsel %vm434, %v587, -inf
    %590 = vmax.xlane.f32.xlu0 %v589
    %v591 = vpop.xlane.xlu0 %590
    %v592 = vsel %vm434, %v588, -inf
    %593 = vmax.xlane.f32.xlu0 %v592
    %v594 = vpop.xlane.xlu0 %593
    %v595 = vsub.f32 %v587, %v591
    %v596 = vsub.f32 %v588, %v594
    %v597 = vmul.f32 %v595, 1.442695
    %v598 = vpow.pop %v597
    %v599 = vmul.f32 %v596, 1.442695
    %v600 = vpow.pop %v599
    %v601 = vsel %vm434, %v598, 0.0
    %602 = vadd.xlane.f32.xlu0 %v601
    %v603 = vpop.xlane.xlu0 %602
    %v604 = vsel %vm434, %v600, 0.0
    %605 = vadd.xlane.f32.xlu0 %v604
    %v606 = vpop.xlane.xlu0 %605
    %v607 = vrcp.pop %v603
    %v608 = vrcp.pop %v606
    %v609 = vmul.f32 %v598, %v607
    %v610 = vmul.f32 %v600, %v608
    %v612 = vsel %vm434, %v609, 0
    %614 = vmatprep.subr.mxu0 0.0
    %615 = vmatpush1.msra.mxu0 %v381
    %616 = vmatprep.subr.mxu0 0.0
    %617 = vmatpush1.msra.mxu0 0.0
    %618 = vmatprep.subr.mxu0 0.0
    %619 = vmatpush1.msra.mxu0 0.0
    %620 = vmatprep.subr.mxu0 0.0
    %621 = vmatpush1.msra.mxu0 0.0
    %622 = vmatprep.subr.mxu0 0.0
    %623 = vmatpush1.msra.mxu0 0.0
    %624 = vmatprep.subr.mxu0 0.0
    %625 = vmatpush1.msra.mxu0 0.0
    %626 = vmatprep.subr.mxu0 0.0
    %627 = vmatpush1.msra.mxu0 0.0
    %628 = vmatprep.subr.mxu0 0.0
    %629 = vmatpush1.msra.mxu0 0.0
    %630 = vmatprep.subr.mxu0 0.0
    %631 = vmatpush1.msra.mxu0 0.0
    %632 = vmatprep.subr.mxu0 0.0
    %633 = vmatpush1.msra.mxu0 0.0
    %634 = vmatprep.subr.mxu0 0.0
    %635 = vmatpush1.msra.mxu0 0.0
    %636 = vmatprep.subr.mxu0 0.0
    %637 = vmatpush1.msra.mxu0 0.0
    %638 = vmatprep.subr.mxu0 0.0
    %639 = vmatpush1.msra.mxu0 0.0
    %640 = vmatprep.subr.mxu0 0.0
    %641 = vmatpush1.msra.mxu0 0.0
    %642 = vmatprep.subr.mxu0 0.0
    %643 = vmatpush1.msra.mxu0 0.0
    %644 = vmatprep.subr.mxu0 0.0
    %645 = vmatpush1.msra.mxu0 0.0
    %646 = vmatprep.subr.mxu0 0.0
    %647 = vmatpush1.msra.mxu0 0.0
    %648 = vmatprep.subr.mxu0 0.0
    %649 = vmatpush1.msra.mxu0 0.0
    %650 = vmatprep.subr.mxu0 0.0
    %651 = vmatpush1.msra.mxu0 0.0
    %652 = vmatprep.subr.mxu0 0.0
    %653 = vmatpush1.msra.mxu0 0.0
    %654 = vmatprep.subr.mxu0 0.0
    %655 = vmatpush1.msra.mxu0 0.0
    %656 = vmatprep.subr.mxu0 0.0
    %657 = vmatpush1.msra.mxu0 0.0
    %658 = vmatprep.subr.mxu0 0.0
    %659 = vmatpush1.msra.mxu0 0.0
    %660 = vmatprep.subr.mxu0 0.0
    %661 = vmatpush1.msra.mxu0 0.0
    %662 = vmatprep.subr.mxu0 0.0
    %663 = vmatpush1.msra.mxu0 0.0
    %664 = vmatprep.subr.mxu0 0.0
    %665 = vmatpush1.msra.mxu0 0.0
    %666 = vmatprep.subr.mxu0 0.0
    %667 = vmatpush1.msra.mxu0 0.0
    %668 = vmatprep.subr.mxu0 0.0
    %669 = vmatpush1.msra.mxu0 0.0
    %670 = vmatprep.subr.mxu0 0.0
    %671 = vmatpush1.msra.mxu0 0.0
    %672 = vmatprep.subr.mxu0 0.0
    %673 = vmatpush1.msra.mxu0 0.0
    %674 = vmatprep.subr.mxu0 0.0
    %675 = vmatpush1.msra.mxu0 0.0
    %676 = vmatprep.subr.mxu0 0.0
    %677 = vmatpush1.msra.mxu0 0.0
    %678 = vmatprep.mubr.f32.mxu0 0.0
    %679 = vmatmul.mubr.f32.gmra.mrb[0].mxu0 %v612
    %v680 = vpop.f32.mrb[0].mxu0
    %v681 = vadd.f32 0.0, %v680
    %v682 = vpop.f32.mrb[0].mxu0
    %683 = vdwg.mxu0
    %v685 = vsel %vm434, %v610, 0
    %687 = vmatprep.subr.mxu0 0.0
    %688 = vmatpush1.msra.mxu0 %v386
    %689 = vmatprep.subr.mxu0 0.0
    %690 = vmatpush1.msra.mxu0 0.0
    %691 = vmatprep.subr.mxu0 0.0
    %692 = vmatpush1.msra.mxu0 0.0
    %693 = vmatprep.subr.mxu0 0.0
    %694 = vmatpush1.msra.mxu0 0.0
    %695 = vmatprep.subr.mxu0 0.0
    %696 = vmatpush1.msra.mxu0 0.0
    %697 = vmatprep.subr.mxu0 0.0
    %698 = vmatpush1.msra.mxu0 0.0
    %699 = vmatprep.subr.mxu0 0.0
    %700 = vmatpush1.msra.mxu0 0.0
    %701 = vmatprep.subr.mxu0 0.0
    %702 = vmatpush1.msra.mxu0 0.0
    %703 = vmatprep.subr.mxu0 0.0
    %704 = vmatpush1.msra.mxu0 0.0
    %705 = vmatprep.subr.mxu0 0.0
    %706 = vmatpush1.msra.mxu0 0.0
    %707 = vmatprep.subr.mxu0 0.0
    %708 = vmatpush1.msra.mxu0 0.0
    %709 = vmatprep.subr.mxu0 0.0
    %710 = vmatpush1.msra.mxu0 0.0
    %711 = vmatprep.subr.mxu0 0.0
    %712 = vmatpush1.msra.mxu0 0.0
    %713 = vmatprep.subr.mxu0 0.0
    %714 = vmatpush1.msra.mxu0 0.0
    %715 = vmatprep.subr.mxu0 0.0
    %716 = vmatpush1.msra.mxu0 0.0
    %717 = vmatprep.subr.mxu0 0.0
    %718 = vmatpush1.msra.mxu0 0.0
    %719 = vmatprep.subr.mxu0 0.0
    %720 = vmatpush1.msra.mxu0 0.0
    %721 = vmatprep.subr.mxu0 0.0
    %722 = vmatpush1.msra.mxu0 0.0
    %723 = vmatprep.subr.mxu0 0.0
    %724 = vmatpush1.msra.mxu0 0.0
    %725 = vmatprep.subr.mxu0 0.0
    %726 = vmatpush1.msra.mxu0 0.0
    %727 = vmatprep.subr.mxu0 0.0
    %728 = vmatpush1.msra.mxu0 0.0
    %729 = vmatprep.subr.mxu0 0.0
    %730 = vmatpush1.msra.mxu0 0.0
    %731 = vmatprep.subr.mxu0 0.0
    %732 = vmatpush1.msra.mxu0 0.0
    %733 = vmatprep.subr.mxu0 0.0
    %734 = vmatpush1.msra.mxu0 0.0
    %735 = vmatprep.subr.mxu0 0.0
    %736 = vmatpush1.msra.mxu0 0.0
    %737 = vmatprep.subr.mxu0 0.0
    %738 = vmatpush1.msra.mxu0 0.0
    %739 = vmatprep.subr.mxu0 0.0
    %740 = vmatpush1.msra.mxu0 0.0
    %741 = vmatprep.subr.mxu0 0.0
    %742 = vmatpush1.msra.mxu0 0.0
    %743 = vmatprep.subr.mxu0 0.0
    %744 = vmatpush1.msra.mxu0 0.0
    %745 = vmatprep.subr.mxu0 0.0
    %746 = vmatpush1.msra.mxu0 0.0
    %747 = vmatprep.subr.mxu0 0.0
    %748 = vmatpush1.msra.mxu0 0.0
    %749 = vmatprep.subr.mxu0 0.0
    %750 = vmatpush1.msra.mxu0 0.0
    %751 = vmatprep.mubr.f32.mxu0 0.0
    %752 = vmatmul.mubr.f32.gmra.mrb[0].mxu0 %v685
    %v753 = vpop.f32.mrb[0].mxu0
    %v754 = vadd.f32 0.0, %v753
    %v755 = vpop.f32.mrb[0].mxu0
    %756 = vdwg.mxu0
    %757 = vrot.lane.b32.xlu0 %v217, 120
    %v758 = vpop.permute.xlu0 %757
    %759 = vrot.lane.b32.xlu0 %v296, 120
    %v760 = vpop.permute.xlu0 %759
    %v761 = vsel %vm434, %v758, 0
    %v763 = vsel %vm434, %v760, 0
    %765 = vmatprep.subr.mxu0 0.0
    %766 = vmatpush1.xpose.msra.mxu0 %v763
    %767 = vmatprep.subr.mxu0 0.0
    %768 = vmatpush1.xpose.msra.mxu0 0.0
    %769 = vmatprep.subr.mxu0 0.0
    %770 = vmatpush1.xpose.msra.mxu0 0.0
    %771 = vmatprep.subr.mxu0 0.0
    %772 = vmatpush1.xpose.msra.mxu0 0.0
    %773 = vmatprep.subr.mxu0 0.0
    %774 = vmatpush1.xpose.msra.mxu0 0.0
    %775 = vmatprep.subr.mxu0 0.0
    %776 = vmatpush1.xpose.msra.mxu0 0.0
    %777 = vmatprep.subr.mxu0 0.0
    %778 = vmatpush1.xpose.msra.mxu0 0.0
    %779 = vmatprep.subr.mxu0 0.0
    %780 = vmatpush1.xpose.msra.mxu0 0.0
    %781 = vmatprep.subr.mxu0 0.0
    %782 = vmatpush1.xpose.msra.mxu0 0.0
    %783 = vmatprep.subr.mxu0 0.0
    %784 = vmatpush1.xpose.msra.mxu0 0.0
    %785 = vmatprep.subr.mxu0 0.0
    %786 = vmatpush1.xpose.msra.mxu0 0.0
    %787 = vmatprep.subr.mxu0 0.0
    %788 = vmatpush1.xpose.msra.mxu0 0.0
    %789 = vmatprep.subr.mxu0 0.0
    %790 = vmatpush1.xpose.msra.mxu0 0.0
    %791 = vmatprep.subr.mxu0 0.0
    %792 = vmatpush1.xpose.msra.mxu0 0.0
    %793 = vmatprep.subr.mxu0 0.0
    %794 = vmatpush1.xpose.msra.mxu0 0.0
    %795 = vmatprep.subr.mxu0 0.0
    %796 = vmatpush1.xpose.msra.mxu0 0.0
    %797 = vmatprep.subr.mxu0 0.0
    %798 = vmatpush1.xpose.msra.mxu0 0.0
    %799 = vmatprep.subr.mxu0 0.0
    %800 = vmatpush1.xpose.msra.mxu0 0.0
    %801 = vmatprep.subr.mxu0 0.0
    %802 = vmatpush1.xpose.msra.mxu0 0.0
    %803 = vmatprep.subr.mxu0 0.0
    %804 = vmatpush1.xpose.msra.mxu0 0.0
    %805 = vmatprep.subr.mxu0 0.0
    %806 = vmatpush1.xpose.msra.mxu0 0.0
    %807 = vmatprep.subr.mxu0 0.0
    %808 = vmatpush1.xpose.msra.mxu0 0.0
    %809 = vmatprep.subr.mxu0 0.0
    %810 = vmatpush1.xpose.msra.mxu0 0.0
    %811 = vmatprep.subr.mxu0 0.0
    %812 = vmatpush1.xpose.msra.mxu0 0.0
    %813 = vmatprep.subr.mxu0 0.0
    %814 = vmatpush1.xpose.msra.mxu0 0.0
    %815 = vmatprep.subr.mxu0 0.0
    %816 = vmatpush1.xpose.msra.mxu0 0.0
    %817 = vmatprep.subr.mxu0 0.0
    %818 = vmatpush1.xpose.msra.mxu0 0.0
    %819 = vmatprep.subr.mxu0 0.0
    %820 = vmatpush1.xpose.msra.mxu0 0.0
    %821 = vmatprep.subr.mxu0 0.0
    %822 = vmatpush1.xpose.msra.mxu0 0.0
    %823 = vmatprep.subr.mxu0 0.0
    %824 = vmatpush1.xpose.msra.mxu0 0.0
    %825 = vmatprep.subr.mxu0 0.0
    %826 = vmatpush1.xpose.msra.mxu0 0.0
    %827 = vmatprep.subr.mxu0 0.0
    %828 = vmatpush1.xpose.msra.mxu0 0.0
    %829 = vmatprep.mubr.f32.mxu0 0.0
    %830 = vmatmul.mubr.f32.gmra.mrb[0].mxu0 %v761
    %v831 = vpop.f32.mrb[0].mxu0
    %v832 = vadd.f32 0.0, %v831
    %v833 = vpop.f32.mrb[0].mxu0
    %834 = vdwg.mxu0
    %835 = vrot.lane.b32.xlu0 %v218, 120
    %v836 = vpop.permute.xlu0 %835
    %837 = vrot.lane.b32.xlu0 %v301, 120
    %v838 = vpop.permute.xlu0 %837
    %v839 = vsel %vm434, %v836, 0
    %v841 = vsel %vm434, %v838, 0
    %843 = vmatprep.subr.mxu0 0.0
    %844 = vmatpush1.xpose.msra.mxu0 %v841
    %845 = vmatprep.subr.mxu0 0.0
    %846 = vmatpush1.xpose.msra.mxu0 0.0
    %847 = vmatprep.subr.mxu0 0.0
    %848 = vmatpush1.xpose.msra.mxu0 0.0
    %849 = vmatprep.subr.mxu0 0.0
    %850 = vmatpush1.xpose.msra.mxu0 0.0
    %851 = vmatprep.subr.mxu0 0.0
    %852 = vmatpush1.xpose.msra.mxu0 0.0
    %853 = vmatprep.subr.mxu0 0.0
    %854 = vmatpush1.xpose.msra.mxu0 0.0
    %855 = vmatprep.subr.mxu0 0.0
    %856 = vmatpush1.xpose.msra.mxu0 0.0
    %857 = vmatprep.subr.mxu0 0.0
    %858 = vmatpush1.xpose.msra.mxu0 0.0
    %859 = vmatprep.subr.mxu0 0.0
    %860 = vmatpush1.xpose.msra.mxu0 0.0
    %861 = vmatprep.subr.mxu0 0.0
    %862 = vmatpush1.xpose.msra.mxu0 0.0
    %863 = vmatprep.subr.mxu0 0.0
    %864 = vmatpush1.xpose.msra.mxu0 0.0
    %865 = vmatprep.subr.mxu0 0.0
    %866 = vmatpush1.xpose.msra.mxu0 0.0
    %867 = vmatprep.subr.mxu0 0.0
    %868 = vmatpush1.xpose.msra.mxu0 0.0
    %869 = vmatprep.subr.mxu0 0.0
    %870 = vmatpush1.xpose.msra.mxu0 0.0
    %871 = vmatprep.subr.mxu0 0.0
    %872 = vmatpush1.xpose.msra.mxu0 0.0
    %873 = vmatprep.subr.mxu0 0.0
    %874 = vmatpush1.xpose.msra.mxu0 0.0
    %875 = vmatprep.subr.mxu0 0.0
    %876 = vmatpush1.xpose.msra.mxu0 0.0
    %877 = vmatprep.subr.mxu0 0.0
    %878 = vmatpush1.xpose.msra.mxu0 0.0
    %879 = vmatprep.subr.mxu0 0.0
    %880 = vmatpush1.xpose.msra.mxu0 0.0
    %881 = vmatprep.subr.mxu0 0.0
    %882 = vmatpush1.xpose.msra.mxu0 0.0
    %883 = vmatprep.subr.mxu0 0.0
    %884 = vmatpush1.xpose.msra.mxu0 0.0
    %885 = vmatprep.subr.mxu0 0.0
    %886 = vmatpush1.xpose.msra.mxu0 0.0
    %887 = vmatprep.subr.mxu0 0.0
    %888 = vmatpush1.xpose.msra.mxu0 0.0
    %889 = vmatprep.subr.mxu0 0.0
    %890 = vmatpush1.xpose.msra.mxu0 0.0
    %891 = vmatprep.subr.mxu0 0.0
    %892 = vmatpush1.xpose.msra.mxu0 0.0
    %893 = vmatprep.subr.mxu0 0.0
    %894 = vmatpush1.xpose.msra.mxu0 0.0
    %895 = vmatprep.subr.mxu0 0.0
    %896 = vmatpush1.xpose.msra.mxu0 0.0
    %897 = vmatprep.subr.mxu0 0.0
    %898 = vmatpush1.xpose.msra.mxu0 0.0
    %899 = vmatprep.subr.mxu0 0.0
    %900 = vmatpush1.xpose.msra.mxu0 0.0
    %901 = vmatprep.subr.mxu0 0.0
    %902 = vmatpush1.xpose.msra.mxu0 0.0
    %903 = vmatprep.subr.mxu0 0.0
    %904 = vmatpush1.xpose.msra.mxu0 0.0
    %905 = vmatprep.subr.mxu0 0.0
    %906 = vmatpush1.xpose.msra.mxu0 0.0
    %907 = vmatprep.mubr.f32.mxu0 0.0
    %908 = vmatmul.mubr.f32.gmra.mrb[0].mxu0 %v839
    %v909 = vpop.f32.mrb[0].mxu0
    %v910 = vadd.f32 0.0, %v909
    %v911 = vpop.f32.mrb[0].mxu0
    %912 = vdwg.mxu0
    %v913 = vsel %vm428, %v832, -1000000.0
    %v914 = vsel %vm429, %v910, -1000000.0
    %v915 = vsel %vm434, %v913, -inf
    %916 = vmax.xlane.f32.xlu0 %v915
    %v917 = vpop.xlane.xlu0 %916
    %v918 = vsel %vm434, %v914, -inf
    %919 = vmax.xlane.f32.xlu0 %v918
    %v920 = vpop.xlane.xlu0 %919
    %v921 = vsub.f32 %v913, %v917
    %v922 = vsub.f32 %v914, %v920
    %v923 = vmul.f32 %v921, 1.442695
    %v924 = vpow.pop %v923
    %v925 = vmul.f32 %v922, 1.442695
    %v926 = vpow.pop %v925
    %v927 = vsel %vm434, %v924, 0.0
    %928 = vadd.xlane.f32.xlu0 %v927
    %v929 = vpop.xlane.xlu0 %928
    %v930 = vsel %vm434, %v926, 0.0
    %931 = vadd.xlane.f32.xlu0 %v930
    %v932 = vpop.xlane.xlu0 %931
    %v933 = vrcp.pop %v929
    %v934 = vrcp.pop %v932
    %v935 = vmul.f32 %v924, %v933
    %v936 = vmul.f32 %v926, %v934
    %938 = vrot.lane.b32.xlu0 %v381, 120
    %v939 = vpop.permute.xlu0 %938
    %v942 = vsel %vm434, %v935, 0
    %944 = vmatprep.subr.mxu0 0.0
    %945 = vmatpush1.msra.mxu0 %v939
    %946 = vmatprep.subr.mxu0 0.0
    %947 = vmatpush1.msra.mxu0 0.0
    %948 = vmatprep.subr.mxu0 0.0
    %949 = vmatpush1.msra.mxu0 0.0
    %950 = vmatprep.subr.mxu0 0.0
    %951 = vmatpush1.msra.mxu0 0.0
    %952 = vmatprep.subr.mxu0 0.0
    %953 = vmatpush1.msra.mxu0 0.0
    %954 = vmatprep.subr.mxu0 0.0
    %955 = vmatpush1.msra.mxu0 0.0
    %956 = vmatprep.subr.mxu0 0.0
    %957 = vmatpush1.msra.mxu0 0.0
    %958 = vmatprep.subr.mxu0 0.0
    %959 = vmatpush1.msra.mxu0 0.0
    %960 = vmatprep.subr.mxu0 0.0
    %961 = vmatpush1.msra.mxu0 0.0
    %962 = vmatprep.subr.mxu0 0.0
    %963 = vmatpush1.msra.mxu0 0.0
    %964 = vmatprep.subr.mxu0 0.0
    %965 = vmatpush1.msra.mxu0 0.0
    %966 = vmatprep.subr.mxu0 0.0
    %967 = vmatpush1.msra.mxu0 0.0
    %968 = vmatprep.subr.mxu0 0.0
    %969 = vmatpush1.msra.mxu0 0.0
    %970 = vmatprep.subr.mxu0 0.0
    %971 = vmatpush1.msra.mxu0 0.0
    %972 = vmatprep.subr.mxu0 0.0
    %973 = vmatpush1.msra.mxu0 0.0
    %974 = vmatprep.subr.mxu0 0.0
    %975 = vmatpush1.msra.mxu0 0.0
    %976 = vmatprep.subr.mxu0 0.0
    %977 = vmatpush1.msra.mxu0 0.0
    %978 = vmatprep.subr.mxu0 0.0
    %979 = vmatpush1.msra.mxu0 0.0
    %980 = vmatprep.subr.mxu0 0.0
    %981 = vmatpush1.msra.mxu0 0.0
    %982 = vmatprep.subr.mxu0 0.0
    %983 = vmatpush1.msra.mxu0 0.0
    %984 = vmatprep.subr.mxu0 0.0
    %985 = vmatpush1.msra.mxu0 0.0
    %986 = vmatprep.subr.mxu0 0.0
    %987 = vmatpush1.msra.mxu0 0.0
    %988 = vmatprep.subr.mxu0 0.0
    %989 = vmatpush1.msra.mxu0 0.0
    %990 = vmatprep.subr.mxu0 0.0
    %991 = vmatpush1.msra.mxu0 0.0
    %992 = vmatprep.subr.mxu0 0.0
    %993 = vmatpush1.msra.mxu0 0.0
    %994 = vmatprep.subr.mxu0 0.0
    %995 = vmatpush1.msra.mxu0 0.0
    %996 = vmatprep.subr.mxu0 0.0
    %997 = vmatpush1.msra.mxu0 0.0
    %998 = vmatprep.subr.mxu0 0.0
    %999 = vmatpush1.msra.mxu0 0.0
    %1000 = vmatprep.subr.mxu0 0.0
    %1001 = vmatpush1.msra.mxu0 0.0
    %1002 = vmatprep.subr.mxu0 0.0
    %1003 = vmatpush1.msra.mxu0 0.0
    %1004 = vmatprep.subr.mxu0 0.0
    %1005 = vmatpush1.msra.mxu0 0.0
    %1006 = vmatprep.subr.mxu0 0.0
    %1007 = vmatpush1.msra.mxu0 0.0
    %1008 = vmatprep.mubr.f32.mxu0 0.0
    %1009 = vmatmul.mubr.f32.gmra.mrb[0].mxu0 %v942
    %v1010 = vpop.f32.mrb[0].mxu0
    %v1011 = vadd.f32 0.0, %v1010
    %v1012 = vpop.f32.mrb[0].mxu0
    %1013 = vdwg.mxu0
    %1015 = vrot.lane.b32.xlu0 %v386, 120
    %v1016 = vpop.permute.xlu0 %1015
    %v1019 = vsel %vm434, %v936, 0
    %1021 = vmatprep.subr.mxu0 0.0
    %1022 = vmatpush1.msra.mxu0 %v1016
    %1023 = vmatprep.subr.mxu0 0.0
    %1024 = vmatpush1.msra.mxu0 0.0
    %1025 = vmatprep.subr.mxu0 0.0
    %1026 = vmatpush1.msra.mxu0 0.0
    %1027 = vmatprep.subr.mxu0 0.0
    %1028 = vmatpush1.msra.mxu0 0.0
    %1029 = vmatprep.subr.mxu0 0.0
    %1030 = vmatpush1.msra.mxu0 0.0
    %1031 = vmatprep.subr.mxu0 0.0
    %1032 = vmatpush1.msra.mxu0 0.0
    %1033 = vmatprep.subr.mxu0 0.0
    %1034 = vmatpush1.msra.mxu0 0.0
    %1035 = vmatprep.subr.mxu0 0.0
    %1036 = vmatpush1.msra.mxu0 0.0
    %1037 = vmatprep.subr.mxu0 0.0
    %1038 = vmatpush1.msra.mxu0 0.0
    %1039 = vmatprep.subr.mxu0 0.0
    %1040 = vmatpush1.msra.mxu0 0.0
    %1041 = vmatprep.subr.mxu0 0.0
    %1042 = vmatpush1.msra.mxu0 0.0
    %1043 = vmatprep.subr.mxu0 0.0
    %1044 = vmatpush1.msra.mxu0 0.0
    %1045 = vmatprep.subr.mxu0 0.0
    %1046 = vmatpush1.msra.mxu0 0.0
    %1047 = vmatprep.subr.mxu0 0.0
    %1048 = vmatpush1.msra.mxu0 0.0
    %1049 = vmatprep.subr.mxu0 0.0
    %1050 = vmatpush1.msra.mxu0 0.0
    %1051 = vmatprep.subr.mxu0 0.0
    %1052 = vmatpush1.msra.mxu0 0.0
    %1053 = vmatprep.subr.mxu0 0.0
    %1054 = vmatpush1.msra.mxu0 0.0
    %1055 = vmatprep.subr.mxu0 0.0
    %1056 = vmatpush1.msra.mxu0 0.0
    %1057 = vmatprep.subr.mxu0 0.0
    %1058 = vmatpush1.msra.mxu0 0.0
    %1059 = vmatprep.subr.mxu0 0.0
    %1060 = vmatpush1.msra.mxu0 0.0
    %1061 = vmatprep.subr.mxu0 0.0
    %1062 = vmatpush1.msra.mxu0 0.0
    %1063 = vmatprep.subr.mxu0 0.0
    %1064 = vmatpush1.msra.mxu0 0.0
    %1065 = vmatprep.subr.mxu0 0.0
    %1066 = vmatpush1.msra.mxu0 0.0
    %1067 = vmatprep.subr.mxu0 0.0
    %1068 = vmatpush1.msra.mxu0 0.0
    %1069 = vmatprep.subr.mxu0 0.0
    %1070 = vmatpush1.msra.mxu0 0.0
    %1071 = vmatprep.subr.mxu0 0.0
    %1072 = vmatpush1.msra.mxu0 0.0
    %1073 = vmatprep.subr.mxu0 0.0
    %1074 = vmatpush1.msra.mxu0 0.0
    %1075 = vmatprep.subr.mxu0 0.0
    %1076 = vmatpush1.msra.mxu0 0.0
    %1077 = vmatprep.subr.mxu0 0.0
    %1078 = vmatpush1.msra.mxu0 0.0
    %1079 = vmatprep.subr.mxu0 0.0
    %1080 = vmatpush1.msra.mxu0 0.0
    %1081 = vmatprep.subr.mxu0 0.0
    %1082 = vmatpush1.msra.mxu0 0.0
    %1083 = vmatprep.subr.mxu0 0.0
    %1084 = vmatpush1.msra.mxu0 0.0
    %1085 = vmatprep.mubr.f32.mxu0 0.0
    %1086 = vmatmul.mubr.f32.gmra.mrb[0].mxu0 %v1019
    %v1087 = vpop.f32.mrb[0].mxu0
    %v1088 = vadd.f32 0.0, %v1087
    %v1089 = vpop.f32.mrb[0].mxu0
    %1090 = vdwg.mxu0
    %v1092 = vsel %vm434, %v1011, 0
    %v1095 = vsel %vm434, %v1088, 0
    %1097 = vmatprep.subr.mxu0 0.0
    %1098 = vmatpush1.msra.mxu0 %v431
    %1099 = vmatprep.subr.mxu0 0.0
    %1100 = vmatpush1.msra.mxu0 0.0
    %1101 = vmatprep.subr.mxu0 0.0
    %1102 = vmatpush1.msra.mxu0 0.0
    %1103 = vmatprep.subr.mxu0 0.0
    %1104 = vmatpush1.msra.mxu0 0.0
    %1105 = vmatprep.subr.mxu0 0.0
    %1106 = vmatpush1.msra.mxu0 0.0
    %1107 = vmatprep.subr.mxu0 0.0
    %1108 = vmatpush1.msra.mxu0 0.0
    %1109 = vmatprep.subr.mxu0 0.0
    %1110 = vmatpush1.msra.mxu0 0.0
    %1111 = vmatprep.subr.mxu0 0.0
    %1112 = vmatpush1.msra.mxu0 0.0
    %1113 = vmatprep.subr.mxu0 0.0
    %1114 = vmatpush1.msra.mxu0 0.0
    %1115 = vmatprep.subr.mxu0 0.0
    %1116 = vmatpush1.msra.mxu0 0.0
    %1117 = vmatprep.subr.mxu0 0.0
    %1118 = vmatpush1.msra.mxu0 0.0
    %1119 = vmatprep.subr.mxu0 0.0
    %1120 = vmatpush1.msra.mxu0 0.0
    %1121 = vmatprep.subr.mxu0 0.0
    %1122 = vmatpush1.msra.mxu0 0.0
    %1123 = vmatprep.subr.mxu0 0.0
    %1124 = vmatpush1.msra.mxu0 0.0
    %1125 = vmatprep.subr.mxu0 0.0
    %1126 = vmatpush1.msra.mxu0 0.0
    %1127 = vmatprep.subr.mxu0 0.0
    %1128 = vmatpush1.msra.mxu0 0.0
    %1129 = vmatprep.subr.mxu0 0.0
    %1130 = vmatpush1.msra.mxu0 0.0
    %1131 = vmatprep.subr.mxu0 0.0
    %1132 = vmatpush1.msra.mxu0 0.0
    %1133 = vmatprep.subr.mxu0 0.0
    %1134 = vmatpush1.msra.mxu0 0.0
    %1135 = vmatprep.subr.mxu0 0.0
    %1136 = vmatpush1.msra.mxu0 0.0
    %1137 = vmatprep.subr.mxu0 0.0
    %1138 = vmatpush1.msra.mxu0 0.0
    %1139 = vmatprep.subr.mxu0 0.0
    %1140 = vmatpush1.msra.mxu0 0.0
    %1141 = vmatprep.subr.mxu0 0.0
    %1142 = vmatpush1.msra.mxu0 0.0
    %1143 = vmatprep.subr.mxu0 0.0
    %1144 = vmatpush1.msra.mxu0 0.0
    %1145 = vmatprep.subr.mxu0 0.0
    %1146 = vmatpush1.msra.mxu0 0.0
    %1147 = vmatprep.subr.mxu0 0.0
    %1148 = vmatpush1.msra.mxu0 0.0
    %1149 = vmatprep.subr.mxu0 0.0
    %1150 = vmatpush1.msra.mxu0 0.0
    %1151 = vmatprep.subr.mxu0 0.0
    %1152 = vmatpush1.msra.mxu0 0.0
    %1153 = vmatprep.subr.mxu0 0.0
    %1154 = vmatpush1.msra.mxu0 0.0
    %1155 = vmatprep.subr.mxu0 0.0
    %1156 = vmatpush1.msra.mxu0 0.0
    %1157 = vmatprep.subr.mxu0 0.0
    %1158 = vmatpush1.msra.mxu0 0.0
    %1159 = vmatprep.subr.mxu0 0.0
    %1160 = vmatpush1.msra.mxu0 0.0
    %1161 = vmatprep.mubr.f32.mxu0 0.0
    %1162 = vmatmul.mubr.f32.gmra.mrb[0].mxu0 %v1092
    %v1163 = vpop.f32.mrb[0].mxu0
    %v1164 = vadd.f32 0.0, %v1163
    %v1165 = vpop.f32.mrb[0].mxu0
    %1166 = vmatprep.mubr.f32.mxu0 0.0
    %1167 = vmatmul.mubr.f32.gmra.mrb[0].mxu0 %v1095
    %v1168 = vpop.f32.mrb[0].mxu0
    %v1169 = vadd.f32 0.0, %v1168
    %v1170 = vpop.f32.mrb[0].mxu0
    %1171 = vdwg.mxu0
    %v1173 = vsel %vm434, %v681, 0
    %v1176 = vsel %vm434, %v754, 0
    %1178 = vmatprep.subr.mxu0 0.0
    %1179 = vmatpush1.msra.mxu0 %v430
    %1180 = vmatprep.subr.mxu0 0.0
    %1181 = vmatpush1.msra.mxu0 0.0
    %1182 = vmatprep.subr.mxu0 0.0
    %1183 = vmatpush1.msra.mxu0 0.0
    %1184 = vmatprep.subr.mxu0 0.0
    %1185 = vmatpush1.msra.mxu0 0.0
    %1186 = vmatprep.subr.mxu0 0.0
    %1187 = vmatpush1.msra.mxu0 0.0
    %1188 = vmatprep.subr.mxu0 0.0
    %1189 = vmatpush1.msra.mxu0 0.0
    %1190 = vmatprep.subr.mxu0 0.0
    %1191 = vmatpush1.msra.mxu0 0.0
    %1192 = vmatprep.subr.mxu0 0.0
    %1193 = vmatpush1.msra.mxu0 0.0
    %1194 = vmatprep.subr.mxu0 0.0
    %1195 = vmatpush1.msra.mxu0 0.0
    %1196 = vmatprep.subr.mxu0 0.0
    %1197 = vmatpush1.msra.mxu0 0.0
    %1198 = vmatprep.subr.mxu0 0.0
    %1199 = vmatpush1.msra.mxu0 0.0
    %1200 = vmatprep.subr.mxu0 0.0
    %1201 = vmatpush1.msra.mxu0 0.0
    %1202 = vmatprep.subr.mxu0 0.0
    %1203 = vmatpush1.msra.mxu0 0.0
    %1204 = vmatprep.subr.mxu0 0.0
    %1205 = vmatpush1.msra.mxu0 0.0
    %1206 = vmatprep.subr.mxu0 0.0
    %1207 = vmatpush1.msra.mxu0 0.0
    %1208 = vmatprep.subr.mxu0 0.0
    %1209 = vmatpush1.msra.mxu0 0.0
    %1210 = vmatprep.subr.mxu0 0.0
    %1211 = vmatpush1.msra.mxu0 0.0
    %1212 = vmatprep.subr.mxu0 0.0
    %1213 = vmatpush1.msra.mxu0 0.0
    %1214 = vmatprep.subr.mxu0 0.0
    %1215 = vmatpush1.msra.mxu0 0.0
    %1216 = vmatprep.subr.mxu0 0.0
    %1217 = vmatpush1.msra.mxu0 0.0
    %1218 = vmatprep.subr.mxu0 0.0
    %1219 = vmatpush1.msra.mxu0 0.0
    %1220 = vmatprep.subr.mxu0 0.0
    %1221 = vmatpush1.msra.mxu0 0.0
    %1222 = vmatprep.subr.mxu0 0.0
    %1223 = vmatpush1.msra.mxu0 0.0
    %1224 = vmatprep.subr.mxu0 0.0
    %1225 = vmatpush1.msra.mxu0 0.0
    %1226 = vmatprep.subr.mxu0 0.0
    %1227 = vmatpush1.msra.mxu0 0.0
    %1228 = vmatprep.subr.mxu0 0.0
    %1229 = vmatpush1.msra.mxu0 0.0
    %1230 = vmatprep.subr.mxu0 0.0
    %1231 = vmatpush1.msra.mxu0 0.0
    %1232 = vmatprep.subr.mxu0 0.0
    %1233 = vmatpush1.msra.mxu0 0.0
    %1234 = vmatprep.subr.mxu0 0.0
    %1235 = vmatpush1.msra.mxu0 0.0
    %1236 = vmatprep.subr.mxu0 0.0
    %1237 = vmatpush1.msra.mxu0 0.0
    %1238 = vmatprep.subr.mxu0 0.0
    %1239 = vmatpush1.msra.mxu0 0.0
    %1240 = vmatprep.subr.mxu0 0.0
    %1241 = vmatpush1.msra.mxu0 0.0
    %1242 = vmatprep.mubr.f32.mxu0 0.0
    %1243 = vmatmul.mubr.f32.gmra.mrb[0].mxu0 %v1173
    %v1244 = vpop.f32.mrb[0].mxu0
    %v1245 = vadd.f32 %v1164, %v1244
    %v1246 = vpop.f32.mrb[0].mxu0
    %1247 = vmatprep.mubr.f32.mxu0 0.0
    %1248 = vmatmul.mubr.f32.gmra.mrb[0].mxu0 %v1176
    %v1249 = vpop.f32.mrb[0].mxu0
    %v1250 = vadd.f32 %v1169, %v1249
    %v1251 = vpop.f32.mrb[0].mxu0
    %1252 = vdwg.mxu0
    %1253 = vrot.lane.b32.xlu0 %v217, 112
    %v1254 = vpop.permute.xlu0 %1253
    %1255 = vrot.lane.b32.xlu0 %v296, 112
    %v1256 = vpop.permute.xlu0 %1255
    %v1257 = vsel %vm434, %v1254, 0
    %v1259 = vsel %vm434, %v1256, 0
    %1261 = vmatprep.subr.mxu0 0.0
    %1262 = vmatpush1.xpose.msra.mxu0 %v1259
    %1263 = vmatprep.subr.mxu0 0.0
    %1264 = vmatpush1.xpose.msra.mxu0 0.0
    %1265 = vmatprep.subr.mxu0 0.0
    %1266 = vmatpush1.xpose.msra.mxu0 0.0
    %1267 = vmatprep.subr.mxu0 0.0
    %1268 = vmatpush1.xpose.msra.mxu0 0.0
    %1269 = vmatprep.subr.mxu0 0.0
    %1270 = vmatpush1.xpose.msra.mxu0 0.0
    %1271 = vmatprep.subr.mxu0 0.0
    %1272 = vmatpush1.xpose.msra.mxu0 0.0
    %1273 = vmatprep.subr.mxu0 0.0
    %1274 = vmatpush1.xpose.msra.mxu0 0.0
    %1275 = vmatprep.subr.mxu0 0.0
    %1276 = vmatpush1.xpose.msra.mxu0 0.0
    %1277 = vmatprep.subr.mxu0 0.0
    %1278 = vmatpush1.xpose.msra.mxu0 0.0
    %1279 = vmatprep.subr.mxu0 0.0
    %1280 = vmatpush1.xpose.msra.mxu0 0.0
    %1281 = vmatprep.subr.mxu0 0.0
    %1282 = vmatpush1.xpose.msra.mxu0 0.0
    %1283 = vmatprep.subr.mxu0 0.0
    %1284 = vmatpush1.xpose.msra.mxu0 0.0
    %1285 = vmatprep.subr.mxu0 0.0
    %1286 = vmatpush1.xpose.msra.mxu0 0.0
    %1287 = vmatprep.subr.mxu0 0.0
    %1288 = vmatpush1.xpose.msra.mxu0 0.0
    %1289 = vmatprep.subr.mxu0 0.0
    %1290 = vmatpush1.xpose.msra.mxu0 0.0
    %1291 = vmatprep.subr.mxu0 0.0
    %1292 = vmatpush1.xpose.msra.mxu0 0.0
    %1293 = vmatprep.subr.mxu0 0.0
    %1294 = vmatpush1.xpose.msra.mxu0 0.0
    %1295 = vmatprep.subr.mxu0 0.0
    %1296 = vmatpush1.xpose.msra.mxu0 0.0
    %1297 = vmatprep.subr.mxu0 0.0
    %1298 = vmatpush1.xpose.msra.mxu0 0.0
    %1299 = vmatprep.subr.mxu0 0.0
    %1300 = vmatpush1.xpose.msra.mxu0 0.0
    %1301 = vmatprep.subr.mxu0 0.0
    %1302 = vmatpush1.xpose.msra.mxu0 0.0
    %1303 = vmatprep.subr.mxu0 0.0
    %1304 = vmatpush1.xpose.msra.mxu0 0.0
    %1305 = vmatprep.subr.mxu0 0.0
    %1306 = vmatpush1.xpose.msra.mxu0 0.0
    %1307 = vmatprep.subr.mxu0 0.0
    %1308 = vmatpush1.xpose.msra.mxu0 0.0
    %1309 = vmatprep.subr.mxu0 0.0
    %1310 = vmatpush1.xpose.msra.mxu0 0.0
    %1311 = vmatprep.subr.mxu0 0.0
    %1312 = vmatpush1.xpose.msra.mxu0 0.0
    %1313 = vmatprep.subr.mxu0 0.0
    %1314 = vmatpush1.xpose.msra.mxu0 0.0
    %1315 = vmatprep.subr.mxu0 0.0
    %1316 = vmatpush1.xpose.msra.mxu0 0.0
    %1317 = vmatprep.subr.mxu0 0.0
    %1318 = vmatpush1.xpose.msra.mxu0 0.0
    %1319 = vmatprep.subr.mxu0 0.0
    %1320 = vmatpush1.xpose.msra.mxu0 0.0
    %1321 = vmatprep.subr.mxu0 0.0
    %1322 = vmatpush1.xpose.msra.mxu0 0.0
    %1323 = vmatprep.subr.mxu0 0.0
    %1324 = vmatpush1.xpose.msra.mxu0 0.0
    %1325 = vmatprep.mubr.f32.mxu0 0.0
    %1326 = vmatmul.mubr.f32.gmra.mrb[0].mxu0 %v1257
    %v1327 = vpop.f32.mrb[0].mxu0
    %v1328 = vadd.f32 0.0, %v1327
    %v1329 = vpop.f32.mrb[0].mxu0
    %1330 = vdwg.mxu0
    %1331 = vrot.lane.b32.xlu0 %v218, 112
    %v1332 = vpop.permute.xlu0 %1331
    %1333 = vrot.lane.b32.xlu0 %v301, 112
    %v1334 = vpop.permute.xlu0 %1333
    %v1335 = vsel %vm434, %v1332, 0
    %v1337 = vsel %vm434, %v1334, 0
    %1339 = vmatprep.subr.mxu0 0.0
    %1340 = vmatpush1.xpose.msra.mxu0 %v1337
    %1341 = vmatprep.subr.mxu0 0.0
    %1342 = vmatpush1.xpose.msra.mxu0 0.0
    %1343 = vmatprep.subr.mxu0 0.0
    %1344 = vmatpush1.xpose.msra.mxu0 0.0
    %1345 = vmatprep.subr.mxu0 0.0
    %1346 = vmatpush1.xpose.msra.mxu0 0.0
    %1347 = vmatprep.subr.mxu0 0.0
    %1348 = vmatpush1.xpose.msra.mxu0 0.0
    %1349 = vmatprep.subr.mxu0 0.0
    %1350 = vmatpush1.xpose.msra.mxu0 0.0
    %1351 = vmatprep.subr.mxu0 0.0
    %1352 = vmatpush1.xpose.msra.mxu0 0.0
    %1353 = vmatprep.subr.mxu0 0.0
    %1354 = vmatpush1.xpose.msra.mxu0 0.0
    %1355 = vmatprep.subr.mxu0 0.0
    %1356 = vmatpush1.xpose.msra.mxu0 0.0
    %1357 = vmatprep.subr.mxu0 0.0
    %1358 = vmatpush1.xpose.msra.mxu0 0.0
    %1359 = vmatprep.subr.mxu0 0.0
    %1360 = vmatpush1.xpose.msra.mxu0 0.0
    %1361 = vmatprep.subr.mxu0 0.0
    %1362 = vmatpush1.xpose.msra.mxu0 0.0
    %1363 = vmatprep.subr.mxu0 0.0
    %1364 = vmatpush1.xpose.msra.mxu0 0.0
    %1365 = vmatprep.subr.mxu0 0.0
    %1366 = vmatpush1.xpose.msra.mxu0 0.0
    %1367 = vmatprep.subr.mxu0 0.0
    %1368 = vmatpush1.xpose.msra.mxu0 0.0
    %1369 = vmatprep.subr.mxu0 0.0
    %1370 = vmatpush1.xpose.msra.mxu0 0.0
    %1371 = vmatprep.subr.mxu0 0.0
    %1372 = vmatpush1.xpose.msra.mxu0 0.0
    %1373 = vmatprep.subr.mxu0 0.0
    %1374 = vmatpush1.xpose.msra.mxu0 0.0
    %1375 = vmatprep.subr.mxu0 0.0
    %1376 = vmatpush1.xpose.msra.mxu0 0.0
    %1377 = vmatprep.subr.mxu0 0.0
    %1378 = vmatpush1.xpose.msra.mxu0 0.0
    %1379 = vmatprep.subr.mxu0 0.0
    %1380 = vmatpush1.xpose.msra.mxu0 0.0
    %1381 = vmatprep.subr.mxu0 0.0
    %1382 = vmatpush1.xpose.msra.mxu0 0.0
    %1383 = vmatprep.subr.mxu0 0.0
    %1384 = vmatpush1.xpose.msra.mxu0 0.0
    %1385 = vmatprep.subr.mxu0 0.0
    %1386 = vmatpush1.xpose.msra.mxu0 0.0
    %1387 = vmatprep.subr.mxu0 0.0
    %1388 = vmatpush1.xpose.msra.mxu0 0.0
    %1389 = vmatprep.subr.mxu0 0.0
    %1390 = vmatpush1.xpose.msra.mxu0 0.0
    %1391 = vmatprep.subr.mxu0 0.0
    %1392 = vmatpush1.xpose.msra.mxu0 0.0
    %1393 = vmatprep.subr.mxu0 0.0
    %1394 = vmatpush1.xpose.msra.mxu0 0.0
    %1395 = vmatprep.subr.mxu0 0.0
    %1396 = vmatpush1.xpose.msra.mxu0 0.0
    %1397 = vmatprep.subr.mxu0 0.0
    %1398 = vmatpush1.xpose.msra.mxu0 0.0
    %1399 = vmatprep.subr.mxu0 0.0
    %1400 = vmatpush1.xpose.msra.mxu0 0.0
    %1401 = vmatprep.subr.mxu0 0.0
    %1402 = vmatpush1.xpose.msra.mxu0 0.0
    %1403 = vmatprep.mubr.f32.mxu0 0.0
    %1404 = vmatmul.mubr.f32.gmra.mrb[0].mxu0 %v1335
    %v1405 = vpop.f32.mrb[0].mxu0
    %v1406 = vadd.f32 0.0, %v1405
    %v1407 = vpop.f32.mrb[0].mxu0
    %1408 = vdwg.mxu0
    %v1409 = vsel %vm428, %v1328, -1000000.0
    %v1410 = vsel %vm429, %v1406, -1000000.0
    %v1411 = vsel %vm434, %v1409, -inf
    %1412 = vmax.xlane.f32.xlu0 %v1411
    %v1413 = vpop.xlane.xlu0 %1412
    %v1414 = vsel %vm434, %v1410, -inf
    %1415 = vmax.xlane.f32.xlu0 %v1414
    %v1416 = vpop.xlane.xlu0 %1415
    %v1417 = vsub.f32 %v1409, %v1413
    %v1418 = vsub.f32 %v1410, %v1416
    %v1419 = vmul.f32 %v1417, 1.442695
    %v1420 = vpow.pop %v1419
    %v1421 = vmul.f32 %v1418, 1.442695
    %v1422 = vpow.pop %v1421
    %v1423 = vsel %vm434, %v1420, 0.0
    %1424 = vadd.xlane.f32.xlu0 %v1423
    %v1425 = vpop.xlane.xlu0 %1424
    %v1426 = vsel %vm434, %v1422, 0.0
    %1427 = vadd.xlane.f32.xlu0 %v1426
    %v1428 = vpop.xlane.xlu0 %1427
    %v1429 = vrcp.pop %v1425
    %v1430 = vrcp.pop %v1428
    %v1431 = vmul.f32 %v1420, %v1429
    %v1432 = vmul.f32 %v1422, %v1430
    %1433 = vrot.lane.b32.xlu0 %v381, 112
    %v1434 = vpop.permute.xlu0 %1433
    %v1437 = vsel %vm434, %v1431, 0
    %1439 = vmatprep.subr.mxu0 0.0
    %1440 = vmatpush1.msra.mxu0 %v1434
    %1441 = vmatprep.subr.mxu0 0.0
    %1442 = vmatpush1.msra.mxu0 0.0
    %1443 = vmatprep.subr.mxu0 0.0
    %1444 = vmatpush1.msra.mxu0 0.0
    %1445 = vmatprep.subr.mxu0 0.0
    %1446 = vmatpush1.msra.mxu0 0.0
    %1447 = vmatprep.subr.mxu0 0.0
    %1448 = vmatpush1.msra.mxu0 0.0
    %1449 = vmatprep.subr.mxu0 0.0
    %1450 = vmatpush1.msra.mxu0 0.0
    %1451 = vmatprep.subr.mxu0 0.0
    %1452 = vmatpush1.msra.mxu0 0.0
    %1453 = vmatprep.subr.mxu0 0.0
    %1454 = vmatpush1.msra.mxu0 0.0
    %1455 = vmatprep.subr.mxu0 0.0
    %1456 = vmatpush1.msra.mxu0 0.0
    %1457 = vmatprep.subr.mxu0 0.0
    %1458 = vmatpush1.msra.mxu0 0.0
    %1459 = vmatprep.subr.mxu0 0.0
    %1460 = vmatpush1.msra.mxu0 0.0
    %1461 = vmatprep.subr.mxu0 0.0
    %1462 = vmatpush1.msra.mxu0 0.0
    %1463 = vmatprep.subr.mxu0 0.0
    %1464 = vmatpush1.msra.mxu0 0.0
    %1465 = vmatprep.subr.mxu0 0.0
    %1466 = vmatpush1.msra.mxu0 0.0
    %1467 = vmatprep.subr.mxu0 0.0
    %1468 = vmatpush1.msra.mxu0 0.0
    %1469 = vmatprep.subr.mxu0 0.0
    %1470 = vmatpush1.msra.mxu0 0.0
    %1471 = vmatprep.subr.mxu0 0.0
    %1472 = vmatpush1.msra.mxu0 0.0
    %1473 = vmatprep.subr.mxu0 0.0
    %1474 = vmatpush1.msra.mxu0 0.0
    %1475 = vmatprep.subr.mxu0 0.0
    %1476 = vmatpush1.msra.mxu0 0.0
    %1477 = vmatprep.subr.mxu0 0.0
    %1478 = vmatpush1.msra.mxu0 0.0
    %1479 = vmatprep.subr.mxu0 0.0
    %1480 = vmatpush1.msra.mxu0 0.0
    %1481 = vmatprep.subr.mxu0 0.0
    %1482 = vmatpush1.msra.mxu0 0.0
    %1483 = vmatprep.subr.mxu0 0.0
    %1484 = vmatpush1.msra.mxu0 0.0
    %1485 = vmatprep.subr.mxu0 0.0
    %1486 = vmatpush1.msra.mxu0 0.0
    %1487 = vmatprep.subr.mxu0 0.0
    %1488 = vmatpush1.msra.mxu0 0.0
    %1489 = vmatprep.subr.mxu0 0.0
    %1490 = vmatpush1.msra.mxu0 0.0
    %1491 = vmatprep.subr.mxu0 0.0
    %1492 = vmatpush1.msra.mxu0 0.0
    %1493 = vmatprep.subr.mxu0 0.0
    %1494 = vmatpush1.msra.mxu0 0.0
    %1495 = vmatprep.subr.mxu0 0.0
    %1496 = vmatpush1.msra.mxu0 0.0
    %1497 = vmatprep.subr.mxu0 0.0
    %1498 = vmatpush1.msra.mxu0 0.0
    %1499 = vmatprep.subr.mxu0 0.0
    %1500 = vmatpush1.msra.mxu0 0.0
    %1501 = vmatprep.subr.mxu0 0.0
    %1502 = vmatpush1.msra.mxu0 0.0
    %1503 = vmatprep.mubr.f32.mxu0 0.0
    %1504 = vmatmul.mubr.f32.gmra.mrb[0].mxu0 %v1437
    %v1505 = vpop.f32.mrb[0].mxu0
    %v1506 = vadd.f32 0.0, %v1505
    %v1507 = vpop.f32.mrb[0].mxu0
    %1508 = vdwg.mxu0
    %1509 = vrot.lane.b32.xlu0 %v386, 112
    %v1510 = vpop.permute.xlu0 %1509
    %v1513 = vsel %vm434, %v1432, 0
    %1515 = vmatprep.subr.mxu0 0.0
    %1516 = vmatpush1.msra.mxu0 %v1510
    %1517 = vmatprep.subr.mxu0 0.0
    %1518 = vmatpush1.msra.mxu0 0.0
    %1519 = vmatprep.subr.mxu0 0.0
    %1520 = vmatpush1.msra.mxu0 0.0
    %1521 = vmatprep.subr.mxu0 0.0
    %1522 = vmatpush1.msra.mxu0 0.0
    %1523 = vmatprep.subr.mxu0 0.0
    %1524 = vmatpush1.msra.mxu0 0.0
    %1525 = vmatprep.subr.mxu0 0.0
    %1526 = vmatpush1.msra.mxu0 0.0
    %1527 = vmatprep.subr.mxu0 0.0
    %1528 = vmatpush1.msra.mxu0 0.0
    %1529 = vmatprep.subr.mxu0 0.0
    %1530 = vmatpush1.msra.mxu0 0.0
    %1531 = vmatprep.subr.mxu0 0.0
    %1532 = vmatpush1.msra.mxu0 0.0
    %1533 = vmatprep.subr.mxu0 0.0
    %1534 = vmatpush1.msra.mxu0 0.0
    %1535 = vmatprep.subr.mxu0 0.0
    %1536 = vmatpush1.msra.mxu0 0.0
    %1537 = vmatprep.subr.mxu0 0.0
    %1538 = vmatpush1.msra.mxu0 0.0
    %1539 = vmatprep.subr.mxu0 0.0
    %1540 = vmatpush1.msra.mxu0 0.0
    %1541 = vmatprep.subr.mxu0 0.0
    %1542 = vmatpush1.msra.mxu0 0.0
    %1543 = vmatprep.subr.mxu0 0.0
    %1544 = vmatpush1.msra.mxu0 0.0
    %1545 = vmatprep.subr.mxu0 0.0
    %1546 = vmatpush1.msra.mxu0 0.0
    %1547 = vmatprep.subr.mxu0 0.0
    %1548 = vmatpush1.msra.mxu0 0.0
    %1549 = vmatprep.subr.mxu0 0.0
    %1550 = vmatpush1.msra.mxu0 0.0
    %1551 = vmatprep.subr.mxu0 0.0
    %1552 = vmatpush1.msra.mxu0 0.0
    %1553 = vmatprep.subr.mxu0 0.0
    %1554 = vmatpush1.msra.mxu0 0.0
    %1555 = vmatprep.subr.mxu0 0.0
    %1556 = vmatpush1.msra.mxu0 0.0
    %1557 = vmatprep.subr.mxu0 0.0
    %1558 = vmatpush1.msra.mxu0 0.0
    %1559 = vmatprep.subr.mxu0 0.0
    %1560 = vmatpush1.msra.mxu0 0.0
    %1561 = vmatprep.subr.mxu0 0.0
    %1562 = vmatpush1.msra.mxu0 0.0
    %1563 = vmatprep.subr.mxu0 0.0
    %1564 = vmatpush1.msra.mxu0 0.0
    %1565 = vmatprep.subr.mxu0 0.0
    %1566 = vmatpush1.msra.mxu0 0.0
    %1567 = vmatprep.subr.mxu0 0.0
    %1568 = vmatpush1.msra.mxu0 0.0
    %1569 = vmatprep.subr.mxu0 0.0
    %1570 = vmatpush1.msra.mxu0 0.0
    %1571 = vmatprep.subr.mxu0 0.0
    %1572 = vmatpush1.msra.mxu0 0.0
    %1573 = vmatprep.subr.mxu0 0.0
    %1574 = vmatpush1.msra.mxu0 0.0
    %1575 = vmatprep.subr.mxu0 0.0
    %1576 = vmatpush1.msra.mxu0 0.0
    %1577 = vmatprep.subr.mxu0 0.0
    %1578 = vmatpush1.msra.mxu0 0.0
    %1579 = vmatprep.mubr.f32.mxu0 0.0
    %1580 = vmatmul.mubr.f32.gmra.mrb[0].mxu0 %v1513
    %v1581 = vpop.f32.mrb[0].mxu0
    %v1582 = vadd.f32 0.0, %v1581
    %v1583 = vpop.f32.mrb[0].mxu0
    %1584 = vdwg.mxu0
    %v1586 = vsel %vm434, %v1506, 0
    %v1589 = vsel %vm434, %v1582, 0
    %1591 = vmatprep.subr.mxu0 0.0
    %1592 = vmatpush1.msra.mxu0 %v432
    %1593 = vmatprep.subr.mxu0 0.0
    %1594 = vmatpush1.msra.mxu0 0.0
    %1595 = vmatprep.subr.mxu0 0.0
    %1596 = vmatpush1.msra.mxu0 0.0
    %1597 = vmatprep.subr.mxu0 0.0
    %1598 = vmatpush1.msra.mxu0 0.0
    %1599 = vmatprep.subr.mxu0 0.0
    %1600 = vmatpush1.msra.mxu0 0.0
    %1601 = vmatprep.subr.mxu0 0.0
    %1602 = vmatpush1.msra.mxu0 0.0
    %1603 = vmatprep.subr.mxu0 0.0
    %1604 = vmatpush1.msra.mxu0 0.0
    %1605 = vmatprep.subr.mxu0 0.0
    %1606 = vmatpush1.msra.mxu0 0.0
    %1607 = vmatprep.subr.mxu0 0.0
    %1608 = vmatpush1.msra.mxu0 0.0
    %1609 = vmatprep.subr.mxu0 0.0
    %1610 = vmatpush1.msra.mxu0 0.0
    %1611 = vmatprep.subr.mxu0 0.0
    %1612 = vmatpush1.msra.mxu0 0.0
    %1613 = vmatprep.subr.mxu0 0.0
    %1614 = vmatpush1.msra.mxu0 0.0
    %1615 = vmatprep.subr.mxu0 0.0
    %1616 = vmatpush1.msra.mxu0 0.0
    %1617 = vmatprep.subr.mxu0 0.0
    %1618 = vmatpush1.msra.mxu0 0.0
    %1619 = vmatprep.subr.mxu0 0.0
    %1620 = vmatpush1.msra.mxu0 0.0
    %1621 = vmatprep.subr.mxu0 0.0
    %1622 = vmatpush1.msra.mxu0 0.0
    %1623 = vmatprep.subr.mxu0 0.0
    %1624 = vmatpush1.msra.mxu0 0.0
    %1625 = vmatprep.subr.mxu0 0.0
    %1626 = vmatpush1.msra.mxu0 0.0
    %1627 = vmatprep.subr.mxu0 0.0
    %1628 = vmatpush1.msra.mxu0 0.0
    %1629 = vmatprep.subr.mxu0 0.0
    %1630 = vmatpush1.msra.mxu0 0.0
    %1631 = vmatprep.subr.mxu0 0.0
    %1632 = vmatpush1.msra.mxu0 0.0
    %1633 = vmatprep.subr.mxu0 0.0
    %1634 = vmatpush1.msra.mxu0 0.0
    %1635 = vmatprep.subr.mxu0 0.0
    %1636 = vmatpush1.msra.mxu0 0.0
    %1637 = vmatprep.subr.mxu0 0.0
    %1638 = vmatpush1.msra.mxu0 0.0
    %1639 = vmatprep.subr.mxu0 0.0
    %1640 = vmatpush1.msra.mxu0 0.0
    %1641 = vmatprep.subr.mxu0 0.0
    %1642 = vmatpush1.msra.mxu0 0.0
    %1643 = vmatprep.subr.mxu0 0.0
    %1644 = vmatpush1.msra.mxu0 0.0
    %1645 = vmatprep.subr.mxu0 0.0
    %1646 = vmatpush1.msra.mxu0 0.0
    %1647 = vmatprep.subr.mxu0 0.0
    %1648 = vmatpush1.msra.mxu0 0.0
    %1649 = vmatprep.subr.mxu0 0.0
    %1650 = vmatpush1.msra.mxu0 0.0
    %1651 = vmatprep.subr.mxu0 0.0
    %1652 = vmatpush1.msra.mxu0 0.0
    %1653 = vmatprep.subr.mxu0 0.0
    %1654 = vmatpush1.msra.mxu0 0.0
    %1655 = vmatprep.mubr.f32.mxu0 0.0
    %1656 = vmatmul.mubr.f32.gmra.mrb[0].mxu0 %v1586
    %v1657 = vpop.f32.mrb[0].mxu0
    %v1658 = vadd.f32 0.0, %v1657
    %v1659 = vpop.f32.mrb[0].mxu0
    %1660 = vmatprep.mubr.f32.mxu0 0.0
    %1661 = vmatmul.mubr.f32.gmra.mrb[0].mxu0 %v1589
    %v1662 = vpop.f32.mrb[0].mxu0
    %v1663 = vadd.f32 0.0, %v1662
    %v1664 = vpop.f32.mrb[0].mxu0
    %1665 = vdwg.mxu0
    %v1666 = vadd.f32 %v1245, %v1658
    %v1667 = vadd.f32 %v1250, %v1663
    %1668 = vrot.lane.b32.xlu0 %v217, 104
    %v1669 = vpop.permute.xlu0 %1668
    %1670 = vrot.lane.b32.xlu0 %v296, 104
    %v1671 = vpop.permute.xlu0 %1670
    %v1672 = vsel %vm434, %v1669, 0
    %v1674 = vsel %vm434, %v1671, 0
    %1676 = vmatprep.subr.mxu0 0.0
    %1677 = vmatpush1.xpose.msra.mxu0 %v1674
    %1678 = vmatprep.subr.mxu0 0.0
    %1679 = vmatpush1.xpose.msra.mxu0 0.0
    %1680 = vmatprep.subr.mxu0 0.0
    %1681 = vmatpush1.xpose.msra.mxu0 0.0
    %1682 = vmatprep.subr.mxu0 0.0
    %1683 = vmatpush1.xpose.msra.mxu0 0.0
    %1684 = vmatprep.subr.mxu0 0.0
    %1685 = vmatpush1.xpose.msra.mxu0 0.0
    %1686 = vmatprep.subr.mxu0 0.0
    %1687 = vmatpush1.xpose.msra.mxu0 0.0
    %1688 = vmatprep.subr.mxu0 0.0
    %1689 = vmatpush1.xpose.msra.mxu0 0.0
    %1690 = vmatprep.subr.mxu0 0.0
    %1691 = vmatpush1.xpose.msra.mxu0 0.0
    %1692 = vmatprep.subr.mxu0 0.0
    %1693 = vmatpush1.xpose.msra.mxu0 0.0
    %1694 = vmatprep.subr.mxu0 0.0
    %1695 = vmatpush1.xpose.msra.mxu0 0.0
    %1696 = vmatprep.subr.mxu0 0.0
    %1697 = vmatpush1.xpose.msra.mxu0 0.0
    %1698 = vmatprep.subr.mxu0 0.0
    %1699 = vmatpush1.xpose.msra.mxu0 0.0
    %1700 = vmatprep.subr.mxu0 0.0
    %1701 = vmatpush1.xpose.msra.mxu0 0.0
    %1702 = vmatprep.subr.mxu0 0.0
    %1703 = vmatpush1.xpose.msra.mxu0 0.0
    %1704 = vmatprep.subr.mxu0 0.0
    %1705 = vmatpush1.xpose.msra.mxu0 0.0
    %1706 = vmatprep.subr.mxu0 0.0
    %1707 = vmatpush1.xpose.msra.mxu0 0.0
    %1708 = vmatprep.subr.mxu0 0.0
    %1709 = vmatpush1.xpose.msra.mxu0 0.0
    %1710 = vmatprep.subr.mxu0 0.0
    %1711 = vmatpush1.xpose.msra.mxu0 0.0
    %1712 = vmatprep.subr.mxu0 0.0
    %1713 = vmatpush1.xpose.msra.mxu0 0.0
    %1714 = vmatprep.subr.mxu0 0.0
    %1715 = vmatpush1.xpose.msra.mxu0 0.0
    %1716 = vmatprep.subr.mxu0 0.0
    %1717 = vmatpush1.xpose.msra.mxu0 0.0
    %1718 = vmatprep.subr.mxu0 0.0
    %1719 = vmatpush1.xpose.msra.mxu0 0.0
    %1720 = vmatprep.subr.mxu0 0.0
    %1721 = vmatpush1.xpose.msra.mxu0 0.0
    %1722 = vmatprep.subr.mxu0 0.0
    %1723 = vmatpush1.xpose.msra.mxu0 0.0
    %1724 = vmatprep.subr.mxu0 0.0
    %1725 = vmatpush1.xpose.msra.mxu0 0.0
    %1726 = vmatprep.subr.mxu0 0.0
    %1727 = vmatpush1.xpose.msra.mxu0 0.0
    %1728 = vmatprep.subr.mxu0 0.0
    %1729 = vmatpush1.xpose.msra.mxu0 0.0
    %1730 = vmatprep.subr.mxu0 0.0
    %1731 = vmatpush1.xpose.msra.mxu0 0.0
    %1732 = vmatprep.subr.mxu0 0.0
    %1733 = vmatpush1.xpose.msra.mxu0 0.0
    %1734 = vmatprep.subr.mxu0 0.0
    %1735 = vmatpush1.xpose.msra.mxu0 0.0
    %1736 = vmatprep.subr.mxu0 0.0
    %1737 = vmatpush1.xpose.msra.mxu0 0.0
    %1738 = vmatprep.subr.mxu0 0.0
    %1739 = vmatpush1.xpose.msra.mxu0 0.0
    %1740 = vmatprep.mubr.f32.mxu0 0.0
    %1741 = vmatmul.mubr.f32.gmra.mrb[0].mxu0 %v1672
    %v1742 = vpop.f32.mrb[0].mxu0
    %v1743 = vadd.f32 0.0, %v1742
    %v1744 = vpop.f32.mrb[0].mxu0
    %1745 = vdwg.mxu0
    %1746 = vrot.lane.b32.xlu0 %v218, 104
    %v1747 = vpop.permute.xlu0 %1746
    %1748 = vrot.lane.b32.xlu0 %v301, 104
    %v1749 = vpop.permute.xlu0 %1748
    %v1750 = vsel %vm434, %v1747, 0
    %v1752 = vsel %vm434, %v1749, 0
    %1754 = vmatprep.subr.mxu0 0.0
    %1755 = vmatpush1.xpose.msra.mxu0 %v1752
    %1756 = vmatprep.subr.mxu0 0.0
    %1757 = vmatpush1.xpose.msra.mxu0 0.0
    %1758 = vmatprep.subr.mxu0 0.0
    %1759 = vmatpush1.xpose.msra.mxu0 0.0
    %1760 = vmatprep.subr.mxu0 0.0
    %1761 = vmatpush1.xpose.msra.mxu0 0.0
    %1762 = vmatprep.subr.mxu0 0.0
    %1763 = vmatpush1.xpose.msra.mxu0 0.0
    %1764 = vmatprep.subr.mxu0 0.0
    %1765 = vmatpush1.xpose.msra.mxu0 0.0
    %1766 = vmatprep.subr.mxu0 0.0
    %1767 = vmatpush1.xpose.msra.mxu0 0.0
    %1768 = vmatprep.subr.mxu0 0.0
    %1769 = vmatpush1.xpose.msra.mxu0 0.0
    %1770 = vmatprep.subr.mxu0 0.0
    %1771 = vmatpush1.xpose.msra.mxu0 0.0
    %1772 = vmatprep.subr.mxu0 0.0
    %1773 = vmatpush1.xpose.msra.mxu0 0.0
    %1774 = vmatprep.subr.mxu0 0.0
    %1775 = vmatpush1.xpose.msra.mxu0 0.0
    %1776 = vmatprep.subr.mxu0 0.0
    %1777 = vmatpush1.xpose.msra.mxu0 0.0
    %1778 = vmatprep.subr.mxu0 0.0
    %1779 = vmatpush1.xpose.msra.mxu0 0.0
    %1780 = vmatprep.subr.mxu0 0.0
    %1781 = vmatpush1.xpose.msra.mxu0 0.0
    %1782 = vmatprep.subr.mxu0 0.0
    %1783 = vmatpush1.xpose.msra.mxu0 0.0
    %1784 = vmatprep.subr.mxu0 0.0
    %1785 = vmatpush1.xpose.msra.mxu0 0.0
    %1786 = vmatprep.subr.mxu0 0.0
    %1787 = vmatpush1.xpose.msra.mxu0 0.0
    %1788 = vmatprep.subr.mxu0 0.0
    %1789 = vmatpush1.xpose.msra.mxu0 0.0
    %1790 = vmatprep.subr.mxu0 0.0
    %1791 = vmatpush1.xpose.msra.mxu0 0.0
    %1792 = vmatprep.subr.mxu0 0.0
    %1793 = vmatpush1.xpose.msra.mxu0 0.0
    %1794 = vmatprep.subr.mxu0 0.0
    %1795 = vmatpush1.xpose.msra.mxu0 0.0
    %1796 = vmatprep.subr.mxu0 0.0
    %1797 = vmatpush1.xpose.msra.mxu0 0.0
    %1798 = vmatprep.subr.mxu0 0.0
    %1799 = vmatpush1.xpose.msra.mxu0 0.0
    %1800 = vmatprep.subr.mxu0 0.0
    %1801 = vmatpush1.xpose.msra.mxu0 0.0
    %1802 = vmatprep.subr.mxu0 0.0
    %1803 = vmatpush1.xpose.msra.mxu0 0.0
    %1804 = vmatprep.subr.mxu0 0.0
    %1805 = vmatpush1.xpose.msra.mxu0 0.0
    %1806 = vmatprep.subr.mxu0 0.0
    %1807 = vmatpush1.xpose.msra.mxu0 0.0
    %1808 = vmatprep.subr.mxu0 0.0
    %1809 = vmatpush1.xpose.msra.mxu0 0.0
    %1810 = vmatprep.subr.mxu0 0.0
    %1811 = vmatpush1.xpose.msra.mxu0 0.0
    %1812 = vmatprep.subr.mxu0 0.0
    %1813 = vmatpush1.xpose.msra.mxu0 0.0
    %1814 = vmatprep.subr.mxu0 0.0
    %1815 = vmatpush1.xpose.msra.mxu0 0.0
    %1816 = vmatprep.subr.mxu0 0.0
    %1817 = vmatpush1.xpose.msra.mxu0 0.0
    %1818 = vmatprep.mubr.f32.mxu0 0.0
    %1819 = vmatmul.mubr.f32.gmra.mrb[0].mxu0 %v1750
    %v1820 = vpop.f32.mrb[0].mxu0
    %v1821 = vadd.f32 0.0, %v1820
    %v1822 = vpop.f32.mrb[0].mxu0
    %1823 = vdwg.mxu0
    %v1824 = vsel %vm428, %v1743, -1000000.0
    %v1825 = vsel %vm429, %v1821, -1000000.0
    %v1826 = vsel %vm434, %v1824, -inf
    %1827 = vmax.xlane.f32.xlu0 %v1826
    %v1828 = vpop.xlane.xlu0 %1827
    %v1829 = vsel %vm434, %v1825, -inf
    %1830 = vmax.xlane.f32.xlu0 %v1829
    %v1831 = vpop.xlane.xlu0 %1830
    %v1832 = vsub.f32 %v1824, %v1828
    %v1833 = vsub.f32 %v1825, %v1831
    %v1834 = vmul.f32 %v1832, 1.442695
    %v1835 = vpow.pop %v1834
    %v1836 = vmul.f32 %v1833, 1.442695
    %v1837 = vpow.pop %v1836
    %v1838 = vsel %vm434, %v1835, 0.0
    %1839 = vadd.xlane.f32.xlu0 %v1838
    %v1840 = vpop.xlane.xlu0 %1839
    %v1841 = vsel %vm434, %v1837, 0.0
    %1842 = vadd.xlane.f32.xlu0 %v1841
    %v1843 = vpop.xlane.xlu0 %1842
    %v1844 = vrcp.pop %v1840
    %v1845 = vrcp.pop %v1843
    %v1846 = vmul.f32 %v1835, %v1844
    %v1847 = vmul.f32 %v1837, %v1845
    %1848 = vrot.lane.b32.xlu0 %v381, 104
    %v1849 = vpop.permute.xlu0 %1848
    %v1852 = vsel %vm434, %v1846, 0
    %1854 = vmatprep.subr.mxu0 0.0
    %1855 = vmatpush1.msra.mxu0 %v1849
    %1856 = vmatprep.subr.mxu0 0.0
    %1857 = vmatpush1.msra.mxu0 0.0
    %1858 = vmatprep.subr.mxu0 0.0
    %1859 = vmatpush1.msra.mxu0 0.0
    %1860 = vmatprep.subr.mxu0 0.0
    %1861 = vmatpush1.msra.mxu0 0.0
    %1862 = vmatprep.subr.mxu0 0.0
    %1863 = vmatpush1.msra.mxu0 0.0
    %1864 = vmatprep.subr.mxu0 0.0
    %1865 = vmatpush1.msra.mxu0 0.0
    %1866 = vmatprep.subr.mxu0 0.0
    %1867 = vmatpush1.msra.mxu0 0.0
    %1868 = vmatprep.subr.mxu0 0.0
    %1869 = vmatpush1.msra.mxu0 0.0
    %1870 = vmatprep.subr.mxu0 0.0
    %1871 = vmatpush1.msra.mxu0 0.0
    %1872 = vmatprep.subr.mxu0 0.0
    %1873 = vmatpush1.msra.mxu0 0.0
    %1874 = vmatprep.subr.mxu0 0.0
    %1875 = vmatpush1.msra.mxu0 0.0
    %1876 = vmatprep.subr.mxu0 0.0
    %1877 = vmatpush1.msra.mxu0 0.0
    %1878 = vmatprep.subr.mxu0 0.0
    %1879 = vmatpush1.msra.mxu0 0.0
    %1880 = vmatprep.subr.mxu0 0.0
    %1881 = vmatpush1.msra.mxu0 0.0
    %1882 = vmatprep.subr.mxu0 0.0
    %1883 = vmatpush1.msra.mxu0 0.0
    %1884 = vmatprep.subr.mxu0 0.0
    %1885 = vmatpush1.msra.mxu0 0.0
    %1886 = vmatprep.subr.mxu0 0.0
    %1887 = vmatpush1.msra.mxu0 0.0
    %1888 = vmatprep.subr.mxu0 0.0
    %1889 = vmatpush1.msra.mxu0 0.0
    %1890 = vmatprep.subr.mxu0 0.0
    %1891 = vmatpush1.msra.mxu0 0.0
    %1892 = vmatprep.subr.mxu0 0.0
    %1893 = vmatpush1.msra.mxu0 0.0
    %1894 = vmatprep.subr.mxu0 0.0
    %1895 = vmatpush1.msra.mxu0 0.0
    %1896 = vmatprep.subr.mxu0 0.0
    %1897 = vmatpush1.msra.mxu0 0.0
    %1898 = vmatprep.subr.mxu0 0.0
    %1899 = vmatpush1.msra.mxu0 0.0
    %1900 = vmatprep.subr.mxu0 0.0
    %1901 = vmatpush1.msra.mxu0 0.0
    %1902 = vmatprep.subr.mxu0 0.0
    %1903 = vmatpush1.msra.mxu0 0.0
    %1904 = vmatprep.subr.mxu0 0.0
    %1905 = vmatpush1.msra.mxu0 0.0
    %1906 = vmatprep.subr.mxu0 0.0
    %1907 = vmatpush1.msra.mxu0 0.0
    %1908 = vmatprep.subr.mxu0 0.0
    %1909 = vmatpush1.msra.mxu0 0.0
    %1910 = vmatprep.subr.mxu0 0.0
    %1911 = vmatpush1.msra.mxu0 0.0
    %1912 = vmatprep.subr.mxu0 0.0
    %1913 = vmatpush1.msra.mxu0 0.0
    %1914 = vmatprep.subr.mxu0 0.0
    %1915 = vmatpush1.msra.mxu0 0.0
    %1916 = vmatprep.subr.mxu0 0.0
    %1917 = vmatpush1.msra.mxu0 0.0
    %1918 = vmatprep.mubr.f32.mxu0 0.0
    %1919 = vmatmul.mubr.f32.gmra.mrb[0].mxu0 %v1852
    %v1920 = vpop.f32.mrb[0].mxu0
    %v1921 = vadd.f32 0.0, %v1920
    %v1922 = vpop.f32.mrb[0].mxu0
    %1923 = vdwg.mxu0
    %1924 = vrot.lane.b32.xlu0 %v386, 104
    %v1925 = vpop.permute.xlu0 %1924
    %v1928 = vsel %vm434, %v1847, 0
    %1930 = vmatprep.subr.mxu0 0.0
    %1931 = vmatpush1.msra.mxu0 %v1925
    %1932 = vmatprep.subr.mxu0 0.0
    %1933 = vmatpush1.msra.mxu0 0.0
    %1934 = vmatprep.subr.mxu0 0.0
    %1935 = vmatpush1.msra.mxu0 0.0
    %1936 = vmatprep.subr.mxu0 0.0
    %1937 = vmatpush1.msra.mxu0 0.0
    %1938 = vmatprep.subr.mxu0 0.0
    %1939 = vmatpush1.msra.mxu0 0.0
    %1940 = vmatprep.subr.mxu0 0.0
    %1941 = vmatpush1.msra.mxu0 0.0
    %1942 = vmatprep.subr.mxu0 0.0
    %1943 = vmatpush1.msra.mxu0 0.0
    %1944 = vmatprep.subr.mxu0 0.0
    %1945 = vmatpush1.msra.mxu0 0.0
    %1946 = vmatprep.subr.mxu0 0.0
    %1947 = vmatpush1.msra.mxu0 0.0
    %1948 = vmatprep.subr.mxu0 0.0
    %1949 = vmatpush1.msra.mxu0 0.0
    %1950 = vmatprep.subr.mxu0 0.0
    %1951 = vmatpush1.msra.mxu0 0.0
    %1952 = vmatprep.subr.mxu0 0.0
    %1953 = vmatpush1.msra.mxu0 0.0
    %1954 = vmatprep.subr.mxu0 0.0
    %1955 = vmatpush1.msra.mxu0 0.0
    %1956 = vmatprep.subr.mxu0 0.0
    %1957 = vmatpush1.msra.mxu0 0.0
    %1958 = vmatprep.subr.mxu0 0.0
    %1959 = vmatpush1.msra.mxu0 0.0
    %1960 = vmatprep.subr.mxu0 0.0
    %1961 = vmatpush1.msra.mxu0 0.0
    %1962 = vmatprep.subr.mxu0 0.0
    %1963 = vmatpush1.msra.mxu0 0.0
    %1964 = vmatprep.subr.mxu0 0.0
    %1965 = vmatpush1.msra.mxu0 0.0
    %1966 = vmatprep.subr.mxu0 0.0
    %1967 = vmatpush1.msra.mxu0 0.0
    %1968 = vmatprep.subr.mxu0 0.0
    %1969 = vmatpush1.msra.mxu0 0.0
    %1970 = vmatprep.subr.mxu0 0.0
    %1971 = vmatpush1.msra.mxu0 0.0
    %1972 = vmatprep.subr.mxu0 0.0
    %1973 = vmatpush1.msra.mxu0 0.0
    %1974 = vmatprep.subr.mxu0 0.0
    %1975 = vmatpush1.msra.mxu0 0.0
    %1976 = vmatprep.subr.mxu0 0.0
    %1977 = vmatpush1.msra.mxu0 0.0
    %1978 = vmatprep.subr.mxu0 0.0
    %1979 = vmatpush1.msra.mxu0 0.0
    %1980 = vmatprep.subr.mxu0 0.0
    %1981 = vmatpush1.msra.mxu0 0.0
    %1982 = vmatprep.subr.mxu0 0.0
    %1983 = vmatpush1.msra.mxu0 0.0
    %1984 = vmatprep.subr.mxu0 0.0
    %1985 = vmatpush1.msra.mxu0 0.0
    %1986 = vmatprep.subr.mxu0 0.0
    %1987 = vmatpush1.msra.mxu0 0.0
    %1988 = vmatprep.subr.mxu0 0.0
    %1989 = vmatpush1.msra.mxu0 0.0
    %1990 = vmatprep.subr.mxu0 0.0
    %1991 = vmatpush1.msra.mxu0 0.0
    %1992 = vmatprep.subr.mxu0 0.0
    %1993 = vmatpush1.msra.mxu0 0.0
    %1994 = vmatprep.mubr.f32.mxu0 0.0
    %1995 = vmatmul.mubr.f32.gmra.mrb[0].mxu0 %v1928
    %v1996 = vpop.f32.mrb[0].mxu0
    %v1997 = vadd.f32 0.0, %v1996
    %v1998 = vpop.f32.mrb[0].mxu0
    %1999 = vdwg.mxu0
    %v2001 = vsel %vm434, %v1921, 0
    %v2004 = vsel %vm434, %v1997, 0
    %2006 = vmatprep.subr.mxu0 0.0
    %2007 = vmatpush1.msra.mxu0 %v433
    %2008 = vmatprep.subr.mxu0 0.0
    %2009 = vmatpush1.msra.mxu0 0.0
    %2010 = vmatprep.subr.mxu0 0.0
    %2011 = vmatpush1.msra.mxu0 0.0
    %2012 = vmatprep.subr.mxu0 0.0
    %2013 = vmatpush1.msra.mxu0 0.0
    %2014 = vmatprep.subr.mxu0 0.0
    %2015 = vmatpush1.msra.mxu0 0.0
    %2016 = vmatprep.subr.mxu0 0.0
    %2017 = vmatpush1.msra.mxu0 0.0
    %2018 = vmatprep.subr.mxu0 0.0
    %2019 = vmatpush1.msra.mxu0 0.0
    %2020 = vmatprep.subr.mxu0 0.0
    %2021 = vmatpush1.msra.mxu0 0.0
    %2022 = vmatprep.subr.mxu0 0.0
    %2023 = vmatpush1.msra.mxu0 0.0
    %2024 = vmatprep.subr.mxu0 0.0
    %2025 = vmatpush1.msra.mxu0 0.0
    %2026 = vmatprep.subr.mxu0 0.0
    %2027 = vmatpush1.msra.mxu0 0.0
    %2028 = vmatprep.subr.mxu0 0.0
    %2029 = vmatpush1.msra.mxu0 0.0
    %2030 = vmatprep.subr.mxu0 0.0
    %2031 = vmatpush1.msra.mxu0 0.0
    %2032 = vmatprep.subr.mxu0 0.0
    %2033 = vmatpush1.msra.mxu0 0.0
    %2034 = vmatprep.subr.mxu0 0.0
    %2035 = vmatpush1.msra.mxu0 0.0
    %2036 = vmatprep.subr.mxu0 0.0
    %2037 = vmatpush1.msra.mxu0 0.0
    %2038 = vmatprep.subr.mxu0 0.0
    %2039 = vmatpush1.msra.mxu0 0.0
    %2040 = vmatprep.subr.mxu0 0.0
    %2041 = vmatpush1.msra.mxu0 0.0
    %2042 = vmatprep.subr.mxu0 0.0
    %2043 = vmatpush1.msra.mxu0 0.0
    %2044 = vmatprep.subr.mxu0 0.0
    %2045 = vmatpush1.msra.mxu0 0.0
    %2046 = vmatprep.subr.mxu0 0.0
    %2047 = vmatpush1.msra.mxu0 0.0
    %2048 = vmatprep.subr.mxu0 0.0
    %2049 = vmatpush1.msra.mxu0 0.0
    %2050 = vmatprep.subr.mxu0 0.0
    %2051 = vmatpush1.msra.mxu0 0.0
    %2052 = vmatprep.subr.mxu0 0.0
    %2053 = vmatpush1.msra.mxu0 0.0
    %2054 = vmatprep.subr.mxu0 0.0
    %2055 = vmatpush1.msra.mxu0 0.0
    %2056 = vmatprep.subr.mxu0 0.0
    %2057 = vmatpush1.msra.mxu0 0.0
    %2058 = vmatprep.subr.mxu0 0.0
    %2059 = vmatpush1.msra.mxu0 0.0
    %2060 = vmatprep.subr.mxu0 0.0
    %2061 = vmatpush1.msra.mxu0 0.0
    %2062 = vmatprep.subr.mxu0 0.0
    %2063 = vmatpush1.msra.mxu0 0.0
    %2064 = vmatprep.subr.mxu0 0.0
    %2065 = vmatpush1.msra.mxu0 0.0
    %2066 = vmatprep.subr.mxu0 0.0
    %2067 = vmatpush1.msra.mxu0 0.0
    %2068 = vmatprep.subr.mxu0 0.0
    %2069 = vmatpush1.msra.mxu0 0.0
    %2070 = vmatprep.mubr.f32.mxu0 0.0
    %2071 = vmatmul.mubr.f32.gmra.mrb[0].mxu0 %v2001
    %v2072 = vpop.f32.mrb[0].mxu0
    %v2073 = vadd.f32 0.0, %v2072
    %v2074 = vpop.f32.mrb[0].mxu0
    %2075 = vmatprep.mubr.f32.mxu0 0.0
    %2076 = vmatmul.mubr.f32.gmra.mrb[0].mxu0 %v2004
    %v2077 = vpop.f32.mrb[0].mxu0
    %v2078 = vadd.f32 0.0, %v2077
    %v2079 = vpop.f32.mrb[0].mxu0
    %2080 = vdwg.mxu0
    %v2081 = vadd.f32 %v1666, %v2073
    %v2082 = vadd.f32 %v1667, %v2078
    %2083 = vst.msk [vmem:[#allocation14] sm:$0xff] %vm135, %v2081
    %2084 = vst.msk [vmem:[#allocation14 + $0x8] sm:$0xff] %vm135, %v2082
    // Predicated region
    $region62: #{tpu_custom_call.1} parent=1 // pred_check
      _
    $region63: #{tpu_custom_call.1} parent=1 // pred_check_branch
      %2086 = sbr.rel (0) target = $region65
    $region64: #{tpu_custom_call.1} parent=1 // pred_region
      %s2088 = ssub.s32 256, 256
      %2089 = vsyncadd [#allocation4], %s2088
      %s2090 = sshll.u32 [#allocation14], 4
      %s2091 = int_to_ptr.vmem [resolvable:$true] %s2090
      %2096 = dma.vmem_to_hbm [thread:$0]  %s2091, 256, %s8, [#allocation4], 128, 128, 8
    $region65: #{tpu_custom_call.1} parent=1 // pred_fallthru
      _
    // Predicated region
    $region66: #{tpu_custom_call.1} parent=1 // pred_check
      _
    $region67: #{tpu_custom_call.1} parent=1 // pred_check_branch
      %2098 = sbr.rel (0) target = $region69
    $region68: #{tpu_custom_call.1} parent=1 // pred_region
      %2099 = dma.done [#allocation4], 256
    $region69: #{tpu_custom_call.1} parent=1 // pred_fallthru
      _
    %2100 = vsyncpa [#allocation3], 1
    %2101 = vsyncpa [#allocation6], 1
    %2102 = vsyncpa [#allocation9], 1
    %2103 = vsyncpa [#allocation12], 1
    %2104 = vsyncpa [#allocation4], 1

</llo_original>
